<compile_context>
chip_gen: v6e
topology: v6e:2x2x1
jax: 0.10.0
libtpu: 0.0.40
codegen_flags: <defaults>
</compile_context>

<pallas_src>
import functools

import jax
import jax.numpy as jnp
from jax.experimental import pallas as pl
from jax.experimental.pallas import tpu as pltpu

EPS = 1e-5
LANE = 128
VMEM_LIMIT_BYTES = 32 * 1024 * 1024  # explicit scoped-VMEM ceiling (fits all gens)


def _ceil_to(n, m):
    return ((n + m - 1) // m) * m


# ---------------------------------------------------------------------------
# Kernel 1: tiled matmul (conv via im2col) + bias + per-tile BN partial stats
# ---------------------------------------------------------------------------
def _conv_bias_stats_kernel(p_ref, w_ref, b_ref, y_ref, stats_ref, acc_ref):
    k = pl.program_id(1)

    @pl.when(k == 0)
    def _():
        acc_ref[...] = jnp.zeros_like(acc_ref)

    acc_ref[...] += jnp.dot(p_ref[...], w_ref[...],
                            preferred_element_type=jnp.float32)

    @pl.when(k == pl.num_programs(1) - 1)
    def _():
        y = acc_ref[...] + b_ref[...]                       # (TM, Cp) f32
        y_ref[...] = y.astype(y_ref.dtype)
        s = jnp.sum(y, axis=0, keepdims=True)               # (1, Cp)
        ss = jnp.sum(y * y, axis=0, keepdims=True)          # (1, Cp)
        stats_ref[0] = jnp.concatenate([s, ss], axis=0)     # (2, Cp)


def conv_bias_stats(patches, w_mat, bias, *, tm, tk, out_dtype):
    mp, kp = patches.shape
    cp = w_mat.shape[1]
    m_tiles, k_tiles = mp // tm, kp // tk
    return pl.pallas_call(
        _conv_bias_stats_kernel,
        out_shape=(jax.ShapeDtypeStruct((mp, cp), out_dtype),
                   jax.ShapeDtypeStruct((m_tiles, 2, cp), jnp.float32)),
        grid_spec=pltpu.PrefetchScalarGridSpec(
            num_scalar_prefetch=0,
            grid=(m_tiles, k_tiles),
            in_specs=[
                pl.BlockSpec((tm, tk), lambda i, k: (i, k)),
                pl.BlockSpec((tk, cp), lambda i, k: (k, 0)),   # weight resident over M
                pl.BlockSpec((1, cp), lambda i, k: (0, 0)),
            ],
            out_specs=[
                pl.BlockSpec((tm, cp), lambda i, k: (i, 0)),
                pl.BlockSpec((1, 2, cp), lambda i, k: (i, 0, 0)),
            ],
            scratch_shapes=[pltpu.VMEM((tm, cp), jnp.float32)],
        ),
        compiler_params=pltpu.CompilerParams(
            dimension_semantics=("parallel", "arbitrary"),
            vmem_limit_bytes=VMEM_LIMIT_BYTES),
    )(patches, w_mat, bias)


# ---------------------------------------------------------------------------
# Kernel 2: streaming BN normalize (+ ReLU), and fused variant with the
#           shortcut normalize + residual add + final ReLU.
# ---------------------------------------------------------------------------
def _bn_apply_kernel(y_ref, scale_ref, shift_ref, o_ref, *, relu):
    out = y_ref[...].astype(jnp.float32) * scale_ref[...] + shift_ref[...]
    if relu:
        out = jnp.maximum(out, 0.0)
    o_ref[...] = out.astype(o_ref.dtype)


def bn_apply(y, scale, shift, *, tm, relu, out_dtype):
    mp, cp = y.shape
    return pl.pallas_call(
        functools.partial(_bn_apply_kernel, relu=relu),
        out_shape=jax.ShapeDtypeStruct((mp, cp), out_dtype),
        grid=(mp // tm,),
        in_specs=[pl.BlockSpec((tm, cp), lambda i: (i, 0)),
                  pl.BlockSpec((1, cp), lambda i: (0, 0)),
                  pl.BlockSpec((1, cp), lambda i: (0, 0))],
        out_specs=pl.BlockSpec((tm, cp), lambda i: (i, 0)),
        compiler_params=pltpu.CompilerParams(
            dimension_semantics=("parallel",),
            vmem_limit_bytes=VMEM_LIMIT_BYTES),
    )(y, scale, shift)


def _bn_add_relu_kernel(y_ref, scale_ref, shift_ref,
                        ys_ref, sscale_ref, sshift_ref, o_ref):
    left = y_ref[...].astype(jnp.float32) * scale_ref[...] + shift_ref[...]
    short = ys_ref[...].astype(jnp.float32) * sscale_ref[...] + sshift_ref[...]
    o_ref[...] = jnp.maximum(left + short, 0.0).astype(o_ref.dtype)


def bn_add_relu(y, scale, shift, ys, sscale, sshift, *, tm, out_dtype):
    mp, cp = y.shape
    return pl.pallas_call(
        _bn_add_relu_kernel,
        out_shape=jax.ShapeDtypeStruct((mp, cp), out_dtype),
        grid=(mp // tm,),
        in_specs=[pl.BlockSpec((tm, cp), lambda i: (i, 0)),
                  pl.BlockSpec((1, cp), lambda i: (0, 0)),
                  pl.BlockSpec((1, cp), lambda i: (0, 0)),
                  pl.BlockSpec((tm, cp), lambda i: (i, 0)),
                  pl.BlockSpec((1, cp), lambda i: (0, 0)),
                  pl.BlockSpec((1, cp), lambda i: (0, 0))],
        out_specs=pl.BlockSpec((tm, cp), lambda i: (i, 0)),
        compiler_params=pltpu.CompilerParams(
            dimension_semantics=("parallel",),
            vmem_limit_bytes=VMEM_LIMIT_BYTES),
    )(y, scale, shift, ys, sscale, sshift)


# ---------------------------------------------------------------------------
# Glue (plain JAX): im2col, weight reshaping, BN coefficient reduction, layout
# ---------------------------------------------------------------------------
def im2col(x_nhwc, kh, kw, stride, pad):
    n, h, w, c = x_nhwc.shape
    xp = jnp.pad(x_nhwc, ((0, 0), (pad, pad), (pad, pad), (0, 0)))
    ho = (h + 2 * pad - kh) // stride + 1
    wo = (w + 2 * pad - kw) // stride + 1
    cols = []
    for i in range(kh):
        for j in range(kw):
            cols.append(xp[:, i:i + stride * ho:stride, j:j + stride * wo:stride, :])
    patches = jnp.concatenate(cols, axis=-1)   # (n, ho, wo, kh*kw*c) with (kh, kw, c) order
    return patches.reshape(n * ho * wo, kh * kw * c), (n, ho, wo)


def w_oihw_to_mat(w):
    # (Cout, Cin, kh, kw) -> (kh*kw*Cin, Cout), matching the im2col K ordering
    cout, cin, kh, kw = w.shape
    return jnp.transpose(w, (2, 3, 1, 0)).reshape(kh * kw * cin, cout)


def _bn_coeffs(stats, bias_p, gamma_p, beta_p, m_valid, pad_rows):
    # Exact batch statistics over the valid M = N*Ho*Wo rows.  Padded patch rows are
    # all-zero, so each contributes exactly `bias` to y: subtract them analytically.
    s = jnp.sum(stats[:, 0, :], axis=0) - pad_rows * bias_p
    ss = jnp.sum(stats[:, 1, :], axis=0) - pad_rows * bias_p * bias_p
    mean = s / m_valid
    var = jnp.maximum(ss / m_valid - mean * mean, 0.0)   # biased var (PyTorch BN norm)
    scale = gamma_p * jax.lax.rsqrt(var + EPS)
    shift = beta_p - mean * scale
    return scale[None, :], shift[None, :]


def residual_block_forward(x_nchw, params, stride=1, *,
                           compute_dtype=jnp.float32, tm=256, tk=128):
    x = jnp.transpose(x_nchw, (0, 2, 3, 1)).astype(jnp.float32)   # NCHW -> NHWC
    cout = params["w1"].shape[0]
    cp = _ceil_to(cout, LANE)                                     # lane-dense channels

    def pad_c(v):
        return jnp.pad(v, (0, cp - cout)).astype(jnp.float32)

    def run_conv(src, w, b, g, be, kh, kw, cstride, pad):
        patches, (n, ho, wo) = im2col(src, kh, kw, cstride, pad)
        m, kdim = patches.shape
        kp = _ceil_to(kdim, LANE)
        mp = _ceil_to(m, tm)
        patches = jnp.pad(patches, ((0, mp - m), (0, kp - kdim))).astype(compute_dtype)
        wm = jnp.pad(w_oihw_to_mat(w),
                     ((0, kp - kdim), (0, cp - cout))).astype(compute_dtype)
        bias_p, gamma_p, beta_p = pad_c(b), pad_c(g), pad_c(be)
        tk_eff = tk if kp % tk == 0 else LANE
        y, stats = conv_bias_stats(patches, wm, bias_p[None, :],
                                   tm=tm, tk=tk_eff, out_dtype=compute_dtype)
        scale, shift = _bn_coeffs(stats, bias_p, gamma_p, beta_p, m, mp - m)
        return y, scale, shift, (n, ho, wo), m

    # left conv1 (3x3, stride, pad=1) -> BN -> ReLU
    y1, sc1, sh1, (n, ho, wo), m = run_conv(
        x, params["w1"], params["b1"], params["g1"], params["be1"], 3, 3, stride, 1)
    left1 = bn_apply(y1, sc1, sh1, tm=tm, relu=True, out_dtype=compute_dtype)

    # shortcut conv (1x1, stride) -> BN is fused into the final kernel (no HBM round-trip)
    ys, scs, shs, _, _ = run_conv(
        x, params["ws"], params["bs"], params["gs"], params["bes"], 1, 1, stride, 0)

    # left conv2 (3x3, stride=1, pad=1) -> BN, fused with shortcut-BN + add + final ReLU
    left1_nhwc = left1[:m, :cout].reshape(n, ho, wo, cout)
    y2, sc2, sh2, _, _ = run_conv(
        left1_nhwc, params["w2"], params["b2"], params["g2"], params["be2"], 3, 3, 1, 1)
    out = bn_add_relu(y2, sc2, sh2, ys, scs, shs, tm=tm, out_dtype=jnp.float32)

    out_nhwc = out[:m, :cout].reshape(n, ho, wo, cout)
    return jnp.transpose(out_nhwc, (0, 3, 1, 2))                  # back to NCHW


# ---------------------------------------------------------------------------
# Pure-JAX reference for verification
# ---------------------------------------------------------------------------
def _conv_ref(x_nhwc, w_oihw, b, stride, pad):
    y = jax.lax.conv_general_dilated(
        x_nhwc, jnp.transpose(w_oihw, (2, 3, 1, 0)),
        window_strides=(stride, stride), padding=[(pad, pad), (pad, pad)],
        dimension_numbers=("NHWC", "HWIO", "NHWC"))
    return y + b


def _bn_ref(y, g, be):
    mean = y.mean(axis=(0, 1, 2))
    var = ((y - mean) ** 2).mean(axis=(0, 1, 2))
    return (y - mean) * jax.lax.rsqrt(var + EPS) * g + be


def residual_block_ref(x_nchw, params, stride=1):
    x = jnp.transpose(x_nchw, (0, 2, 3, 1)).astype(jnp.float32)
    l = _bn_ref(_conv_ref(x, params["w1"], params["b1"], stride, 1), params["g1"], params["be1"])
    l = jnp.maximum(l, 0.0)
    l = _bn_ref(_conv_ref(l, params["w2"], params["b2"], 1, 1), params["g2"], params["be2"])
    s = _bn_ref(_conv_ref(x, params["ws"], params["bs"], stride, 0), params["gs"], params["bes"])
    out = jnp.maximum(l + s, 0.0)
    return jnp.transpose(out, (0, 3, 1, 2))


# ---------------------------------------------------------------------------
if __name__ == "__main__":
    key = jax.random.PRNGKey(0)
    inch, outch = 4, 8
    n, h, w = 2, 16, 16

    ks = jax.random.split(key, 13)
    params = {
        "w1": jax.random.normal(ks[0], (outch, inch, 3, 3), jnp.float32) * 0.2,
        "b1": jax.random.normal(ks[1], (outch,), jnp.float32) * 0.1,
        "g1": 1.0 + 0.1 * jax.random.normal(ks[2], (outch,), jnp.float32),
        "be1": 0.1 * jax.random.normal(ks[3], (outch,), jnp.float32),
        "w2": jax.random.normal(ks[4], (outch, outch, 3, 3), jnp.float32) * 0.2,
        "b2": jax.random.normal(ks[5], (outch,), jnp.float32) * 0.1,
        "g2": 1.0 + 0.1 * jax.random.normal(ks[6], (outch,), jnp.float32),
        "be2": 0.1 * jax.random.normal(ks[7], (outch,), jnp.float32),
        "ws": jax.random.normal(ks[8], (outch, inch, 1, 1), jnp.float32) * 0.2,
        "bs": jax.random.normal(ks[9], (outch,), jnp.float32) * 0.1,
        "gs": 1.0 + 0.1 * jax.random.normal(ks[10], (outch,), jnp.float32),
        "bes": 0.1 * jax.random.normal(ks[11], (outch,), jnp.float32),
    }
    x = jax.random.normal(ks[12], (n, inch, h, w), jnp.float32)

    # f32-operand path (tight check); stride=2 also exercises the padded-M-row path.
    for stride in (1, 2):
        fwd = jax.jit(functools.partial(residual_block_forward, stride=stride,
                                        compute_dtype=jnp.float32, tm=256, tk=128))
        out = jax.block_until_ready(fwd(x, params))
        ref = residual_block_ref(x, params, stride=stride)
        assert out.shape == ref.shape == (n, outch, h // stride, w // stride)
        err = float(jnp.max(jnp.abs(out - ref)))
        assert jnp.allclose(out, ref, atol=2e-3, rtol=2e-3), (stride, err)

    # bf16 matmul operands / intermediates (recommended on v6e/v7x); looser check.
    fwd_bf16 = jax.jit(functools.partial(residual_block_forward, stride=1,
                                         compute_dtype=jnp.bfloat16, tm=256, tk=128))
    out_bf16 = jax.block_until_ready(fwd_bf16(x, params))
    ref1 = residual_block_ref(x, params, stride=1)
    assert jnp.allclose(out_bf16, ref1, atol=0.15, rtol=0.15), \
        float(jnp.max(jnp.abs(out_bf16 - ref1)))

    print("KERNEL_OK")
</pallas_src>

<mosaic_0001>
module attributes {stable_mosaic.version = 11 : i64} {
  func.func @_conv_bias_stats_kernel(%arg0: i32, %arg1: i32, %arg2: memref<256x128xf32, #tpu.memory_space<vmem>>, %arg3: memref<128x128xf32, #tpu.memory_space<vmem>>, %arg4: memref<1x128xf32, #tpu.memory_space<vmem>>, %arg5: memref<256x128xf32, #tpu.memory_space<vmem>>, %arg6: memref<1x2x128xf32, #tpu.memory_space<vmem>>, %arg7: memref<256x128xf32, #tpu.memory_space<vmem>>) attributes {dimension_semantics = [#tpu.dimension_semantics<parallel>, #tpu.dimension_semantics<arbitrary>], iteration_bounds = array<i64: 2, 1>, scalar_prefetch = 0 : i64, scratch_operands = 1 : i64, tpu.core_type = #tpu.core_type<tc>, window_params = [{transform_indices = @transform_0, window_bounds = array<i64: 256, 128>}, {transform_indices = @transform_1, window_bounds = array<i64: 128, 128>}, {pipeline_mode = #tpu.pipeline_mode<synchronous>, transform_indices = @transform_2, window_bounds = array<i64: 1, 128>}, {transform_indices = @transform_3, window_bounds = array<i64: 256, 128>}, {transform_indices = @transform_4, window_bounds = array<i64: 1, 2, 128>}]} {
    %c0_i32 = arith.constant 0 : i32
    %0 = arith.cmpi eq, %arg1, %c0_i32 : i32
    %1 = arith.extui %0 : i1 to i32
    %c0_i32_0 = arith.constant 0 : i32
    %2 = arith.cmpi ne, %1, %c0_i32_0 : i32
    scf.if %2 {
      %cst_10 = arith.constant 0.000000e+00 : f32
      %12 = vector.broadcast %cst_10 : f32 to vector<256x128xf32>
      %c0_11 = arith.constant 0 : index
      %c0_12 = arith.constant 0 : index
      %13 = vector.load %arg7[%c0_11, %c0_12] : memref<256x128xf32, #tpu.memory_space<vmem>>, vector<256x128xf32>
      tpu.vector_store %arg7[%c0_11, %c0_12], %12 {strides = array<i32>} : memref<256x128xf32, #tpu.memory_space<vmem>>, vector<256x128xf32>,
    } else {
    }
    %c0 = arith.constant 0 : index
    %c0_1 = arith.constant 0 : index
    %3 = vector.load %arg7[%c0, %c0_1] : memref<256x128xf32, #tpu.memory_space<vmem>>, vector<256x128xf32>
    %c0_2 = arith.constant 0 : index
    %c0_3 = arith.constant 0 : index
    %4 = vector.load %arg2[%c0_2, %c0_3] : memref<256x128xf32, #tpu.memory_space<vmem>>, vector<256x128xf32>
    %c0_4 = arith.constant 0 : index
    %c0_5 = arith.constant 0 : index
    %5 = vector.load %arg3[%c0_4, %c0_5] : memref<128x128xf32, #tpu.memory_space<vmem>>, vector<128x128xf32>
    %cst = arith.constant dense<0.000000e+00> : vector<256x128xf32>
    %6 = tpu.matmul %4, %5, %cst {dimension_numbers = #tpu.dot_dimension_numbers<[1], [0], [0], [1], [0, 0, 1, 1], [], []>} : vector<256x128xf32>, vector<128x128xf32>, vector<256x128xf32> -> vector<256x128xf32>
    %7 = arith.addf %3, %6 : vector<256x128xf32>
    %c0_6 = arith.constant 0 : index
    %c0_7 = arith.constant 0 : index
    %8 = vector.load %arg7[%c0_6, %c0_7] : memref<256x128xf32, #tpu.memory_space<vmem>>, vector<256x128xf32>
    tpu.vector_store %arg7[%c0_6, %c0_7], %7 {strides = array<i32>} : memref<256x128xf32, #tpu.memory_space<vmem>>, vector<256x128xf32>,
    %c0_i32_8 = arith.constant 0 : i32
    %9 = arith.cmpi eq, %arg1, %c0_i32_8 : i32
    %10 = arith.extui %9 : i1 to i32
    %c0_i32_9 = arith.constant 0 : i32
    %11 = arith.cmpi ne, %10, %c0_i32_9 : i32
    scf.if %11 {
      %c0_10 = arith.constant 0 : index
      %c0_11 = arith.constant 0 : index
      %12 = vector.load %arg7[%c0_10, %c0_11] : memref<256x128xf32, #tpu.memory_space<vmem>>, vector<256x128xf32>
      %c0_12 = arith.constant 0 : index
      %c0_13 = arith.constant 0 : index
      %13 = vector.load %arg4[%c0_12, %c0_13] : memref<1x128xf32, #tpu.memory_space<vmem>>, vector<1x128xf32>
      %14 = vector.broadcast %13 : vector<1x128xf32> to vector<256x128xf32>
      %15 = arith.addf %12, %14 : vector<256x128xf32>
      %c0_14 = arith.constant 0 : index
      %c0_15 = arith.constant 0 : index
      %16 = vector.load %arg5[%c0_14, %c0_15] : memref<256x128xf32, #tpu.memory_space<vmem>>, vector<256x128xf32>
      tpu.vector_store %arg5[%c0_14, %c0_15], %15 {strides = array<i32>} : memref<256x128xf32, #tpu.memory_space<vmem>>, vector<256x128xf32>,
      %cst_16 = arith.constant dense<0.000000e+00> : vector<128xf32>
      %17 = vector.multi_reduction <add>, %15, %cst_16 [0] : vector<256x128xf32> to vector<128xf32>
      %18 = vector.shape_cast %17 : vector<128xf32> to vector<1x128xf32>
      %19 = arith.mulf %15, %15 : vector<256x128xf32>
      %cst_17 = arith.constant dense<0.000000e+00> : vector<128xf32>
      %20 = vector.multi_reduction <add>, %19, %cst_17 [0] : vector<256x128xf32> to vector<128xf32>
      %21 = vector.shape_cast %20 : vector<128xf32> to vector<1x128xf32>
      %22 = tpu.concatenate %18, %21 in 0 : vector<1x128xf32>, vector<1x128xf32> -> vector<2x128xf32>
      %c0_18 = arith.constant 0 : index
      %c0_19 = arith.constant 0 : index
      %c0_20 = arith.constant 0 : index
      %23 = vector.load %arg6[%c0_18, %c0_19, %c0_20] : memref<1x2x128xf32, #tpu.memory_space<vmem>>, vector<1x2x128xf32>
      %24 = vector.shape_cast %23 : vector<1x2x128xf32> to vector<2x128xf32>
      %25 = vector.shape_cast %22 : vector<2x128xf32> to vector<1x2x128xf32>
      tpu.vector_store %arg6[%c0_18, %c0_19, %c0_20], %25 {strides = array<i32>} : memref<1x2x128xf32, #tpu.memory_space<vmem>>, vector<1x2x128xf32>,
    } else {
    }
    return
  }
  func.func @transform_0(%arg0: i32, %arg1: i32) -> (i32, i32) {
    %c0_i32 = arith.constant 0 : i32
    return %arg0, %arg1 : i32, i32
  }
  func.func @transform_1(%arg0: i32, %arg1: i32) -> (i32, i32) {
    %c0_i32 = arith.constant 0 : i32
    %c0_i32_0 = arith.constant 0 : i32
    return %arg1, %c0_i32 : i32, i32
  }
  func.func @transform_2(%arg0: i32, %arg1: i32) -> (i32, i32) {
    %c0_i32 = arith.constant 0 : i32
    %c0_i32_0 = arith.constant 0 : i32
    %c0_i32_1 = arith.constant 0 : i32
    return %c0_i32, %c0_i32_0 : i32, i32
  }
  func.func @transform_3(%arg0: i32, %arg1: i32) -> (i32, i32) {
    %c0_i32 = arith.constant 0 : i32
    %c0_i32_0 = arith.constant 0 : i32
    return %arg0, %c0_i32 : i32, i32
  }
  func.func @transform_4(%arg0: i32, %arg1: i32) -> (i32, i32, i32) {
    %c0_i32 = arith.constant 0 : i32
    %c0_i32_0 = arith.constant 0 : i32
    %c0_i32_1 = arith.constant 0 : i32
    return %arg0, %c0_i32, %c0_i32_0 : i32, i32, i32
  }
}

module attributes {stable_mosaic.version = 11 : i64} {
  func.func @_bn_apply_kernel(%arg0: i32, %arg1: memref<256x128xf32, #tpu.memory_space<vmem>>, %arg2: memref<1x128xf32, #tpu.memory_space<vmem>>, %arg3: memref<1x128xf32, #tpu.memory_space<vmem>>, %arg4: memref<256x128xf32, #tpu.memory_space<vmem>>) attributes {dimension_semantics = [#tpu.dimension_semantics<parallel>], iteration_bounds = array<i64: 2>, scalar_prefetch = 0 : i64, scratch_operands = 0 : i64, tpu.core_type = #tpu.core_type<tc>, window_params = [{transform_indices = @transform_0, window_bounds = array<i64: 256, 128>}, {pipeline_mode = #tpu.pipeline_mode<synchronous>, transform_indices = @transform_1, window_bounds = array<i64: 1, 128>}, {pipeline_mode = #tpu.pipeline_mode<synchronous>, transform_indices = @transform_2, window_bounds = array<i64: 1, 128>}, {transform_indices = @transform_3, window_bounds = array<i64: 256, 128>}]} {
    %c0 = arith.constant 0 : index
    %c0_0 = arith.constant 0 : index
    %0 = vector.load %arg1[%c0, %c0_0] : memref<256x128xf32, #tpu.memory_space<vmem>>, vector<256x128xf32>
    %c0_1 = arith.constant 0 : index
    %c0_2 = arith.constant 0 : index
    %1 = vector.load %arg2[%c0_1, %c0_2] : memref<1x128xf32, #tpu.memory_space<vmem>>, vector<1x128xf32>
    %2 = vector.broadcast %1 : vector<1x128xf32> to vector<256x128xf32>
    %3 = arith.mulf %0, %2 : vector<256x128xf32>
    %c0_3 = arith.constant 0 : index
    %c0_4 = arith.constant 0 : index
    %4 = vector.load %arg3[%c0_3, %c0_4] : memref<1x128xf32, #tpu.memory_space<vmem>>, vector<1x128xf32>
    %5 = vector.broadcast %4 : vector<1x128xf32> to vector<256x128xf32>
    %6 = arith.addf %3, %5 : vector<256x128xf32>
    %cst = arith.constant 0.000000e+00 : f32
    %7 = vector.broadcast %cst : f32 to vector<256x128xf32>
    %8 = arith.maximumf %6, %7 : vector<256x128xf32>
    %c0_5 = arith.constant 0 : index
    %c0_6 = arith.constant 0 : index
    %9 = vector.load %arg4[%c0_5, %c0_6] : memref<256x128xf32, #tpu.memory_space<vmem>>, vector<256x128xf32>
    tpu.vector_store %arg4[%c0_5, %c0_6], %8 {strides = array<i32>} : memref<256x128xf32, #tpu.memory_space<vmem>>, vector<256x128xf32>,
    return
  }
  func.func @transform_0(%arg0: i32) -> (i32, i32) {
    %c0_i32 = arith.constant 0 : i32
    %c0_i32_0 = arith.constant 0 : i32
    return %arg0, %c0_i32 : i32, i32
  }
  func.func @transform_1(%arg0: i32) -> (i32, i32) {
    %c0_i32 = arith.constant 0 : i32
    %c0_i32_0 = arith.constant 0 : i32
    %c0_i32_1 = arith.constant 0 : i32
    return %c0_i32, %c0_i32_0 : i32, i32
  }
  func.func @transform_2(%arg0: i32) -> (i32, i32) {
    %c0_i32 = arith.constant 0 : i32
    %c0_i32_0 = arith.constant 0 : i32
    %c0_i32_1 = arith.constant 0 : i32
    return %c0_i32, %c0_i32_0 : i32, i32
  }
  func.func @transform_3(%arg0: i32) -> (i32, i32) {
    %c0_i32 = arith.constant 0 : i32
    %c0_i32_0 = arith.constant 0 : i32
    return %arg0, %c0_i32 : i32, i32
  }
}

module attributes {stable_mosaic.version = 11 : i64} {
  func.func @_bn_add_relu_kernel(%arg0: i32, %arg1: memref<256x128xf32, #tpu.memory_space<vmem>>, %arg2: memref<1x128xf32, #tpu.memory_space<vmem>>, %arg3: memref<1x128xf32, #tpu.memory_space<vmem>>, %arg4: memref<256x128xf32, #tpu.memory_space<vmem>>, %arg5: memref<1x128xf32, #tpu.memory_space<vmem>>, %arg6: memref<1x128xf32, #tpu.memory_space<vmem>>, %arg7: memref<256x128xf32, #tpu.memory_space<vmem>>) attributes {dimension_semantics = [#tpu.dimension_semantics<parallel>], iteration_bounds = array<i64: 2>, scalar_prefetch = 0 : i64, scratch_operands = 0 : i64, tpu.core_type = #tpu.core_type<tc>, window_params = [{transform_indices = @transform_0, window_bounds = array<i64: 256, 128>}, {pipeline_mode = #tpu.pipeline_mode<synchronous>, transform_indices = @transform_1, window_bounds = array<i64: 1, 128>}, {pipeline_mode = #tpu.pipeline_mode<synchronous>, transform_indices = @transform_2, window_bounds = array<i64: 1, 128>}, {transform_indices = @transform_3, window_bounds = array<i64: 256, 128>}, {pipeline_mode = #tpu.pipeline_mode<synchronous>, transform_indices = @transform_4, window_bounds = array<i64: 1, 128>}, {pipeline_mode = #tpu.pipeline_mode<synchronous>, transform_indices = @transform_5, window_bounds = array<i64: 1, 128>}, {transform_indices = @transform_6, window_bounds = array<i64: 256, 128>}]} {
    %c0 = arith.constant 0 : index
    %c0_0 = arith.constant 0 : index
    %0 = vector.load %arg1[%c0, %c0_0] : memref<256x128xf32, #tpu.memory_space<vmem>>, vector<256x128xf32>
    %c0_1 = arith.constant 0 : index
    %c0_2 = arith.constant 0 : index
    %1 = vector.load %arg2[%c0_1, %c0_2] : memref<1x128xf32, #tpu.memory_space<vmem>>, vector<1x128xf32>
    %2 = vector.broadcast %1 : vector<1x128xf32> to vector<256x128xf32>
    %3 = arith.mulf %0, %2 : vector<256x128xf32>
    %c0_3 = arith.constant 0 : index
    %c0_4 = arith.constant 0 : index
    %4 = vector.load %arg3[%c0_3, %c0_4] : memref<1x128xf32, #tpu.memory_space<vmem>>, vector<1x128xf32>
    %5 = vector.broadcast %4 : vector<1x128xf32> to vector<256x128xf32>
    %6 = arith.addf %3, %5 : vector<256x128xf32>
    %c0_5 = arith.constant 0 : index
    %c0_6 = arith.constant 0 : index
    %7 = vector.load %arg4[%c0_5, %c0_6] : memref<256x128xf32, #tpu.memory_space<vmem>>, vector<256x128xf32>
    %c0_7 = arith.constant 0 : index
    %c0_8 = arith.constant 0 : index
    %8 = vector.load %arg5[%c0_7, %c0_8] : memref<1x128xf32, #tpu.memory_space<vmem>>, vector<1x128xf32>
    %9 = vector.broadcast %8 : vector<1x128xf32> to vector<256x128xf32>
    %10 = arith.mulf %7, %9 : vector<256x128xf32>
    %c0_9 = arith.constant 0 : index
    %c0_10 = arith.constant 0 : index
    %11 = vector.load %arg6[%c0_9, %c0_10] : memref<1x128xf32, #tpu.memory_space<vmem>>, vector<1x128xf32>
    %12 = vector.broadcast %11 : vector<1x128xf32> to vector<256x128xf32>
    %13 = arith.addf %10, %12 : vector<256x128xf32>
    %14 = arith.addf %6, %13 : vector<256x128xf32>
    %cst = arith.constant 0.000000e+00 : f32
    %15 = vector.broadcast %cst : f32 to vector<256x128xf32>
    %16 = arith.maximumf %14, %15 : vector<256x128xf32>
    %c0_11 = arith.constant 0 : index
    %c0_12 = arith.constant 0 : index
    %17 = vector.load %arg7[%c0_11, %c0_12] : memref<256x128xf32, #tpu.memory_space<vmem>>, vector<256x128xf32>
    tpu.vector_store %arg7[%c0_11, %c0_12], %16 {strides = array<i32>} : memref<256x128xf32, #tpu.memory_space<vmem>>, vector<256x128xf32>,
    return
  }
  func.func @transform_0(%arg0: i32) -> (i32, i32) {
    %c0_i32 = arith.constant 0 : i32
    %c0_i32_0 = arith.constant 0 : i32
    return %arg0, %c0_i32 : i32, i32
  }
  func.func @transform_1(%arg0: i32) -> (i32, i32) {
    %c0_i32 = arith.constant 0 : i32
    %c0_i32_0 = arith.constant 0 : i32
    %c0_i32_1 = arith.constant 0 : i32
    return %c0_i32, %c0_i32_0 : i32, i32
  }
  func.func @transform_2(%arg0: i32) -> (i32, i32) {
    %c0_i32 = arith.constant 0 : i32
    %c0_i32_0 = arith.constant 0 : i32
    %c0_i32_1 = arith.constant 0 : i32
    return %c0_i32, %c0_i32_0 : i32, i32
  }
  func.func @transform_3(%arg0: i32) -> (i32, i32) {
    %c0_i32 = arith.constant 0 : i32
    %c0_i32_0 = arith.constant 0 : i32
    return %arg0, %c0_i32 : i32, i32
  }
  func.func @transform_4(%arg0: i32) -> (i32, i32) {
    %c0_i32 = arith.constant 0 : i32
    %c0_i32_0 = arith.constant 0 : i32
    %c0_i32_1 = arith.constant 0 : i32
    return %c0_i32, %c0_i32_0 : i32, i32
  }
  func.func @transform_5(%arg0: i32) -> (i32, i32) {
    %c0_i32 = arith.constant 0 : i32
    %c0_i32_0 = arith.constant 0 : i32
    %c0_i32_1 = arith.constant 0 : i32
    return %c0_i32, %c0_i32_0 : i32, i32
  }
  func.func @transform_6(%arg0: i32) -> (i32, i32) {
    %c0_i32 = arith.constant 0 : i32
    %c0_i32_0 = arith.constant 0 : i32
    return %arg0, %c0_i32 : i32, i32
  }
}

</mosaic_0001>

<llo_original>
// kernel: residual_block_forward.6
$region0: #{residual_block_forward.6}
  #allocation0 [shape = 'u32[]', space=smem, size = 0x4, offset = 0x4, fixed_abs, tag = 'smem constant byte address 0x4 - core index']
  #allocation1 [shape = 'u32[144,128]{1,0:T(1,128)}', space=vmem, size = 0x12000, scoped, tag = 'internal scratch']
  %s0 = inlined_call_operand.vmem [shape: f32[512,128], index: 0, kind: input, shape index: {}]
  %s1 = inlined_call_operand.vmem [shape: f32[1,128], index: 1, kind: input, shape index: {}]
  %s2 = inlined_call_operand.vmem [shape: f32[1,128], index: 2, kind: input, shape index: {}]
  %s3 = inlined_call_operand.vmem [shape: f32[512,128], index: 3, kind: output, shape index: {}]
  %s4 = sld [smem:[#allocation0]]
  $region45: #{residual_block_forward.6} parent=0
    _
  %s6 = ssub.s32 1, %s4
  %s7 = scalar_select 0, %s6, %s4
  loop: start=0, step=1, limit=4
  $region2: #{residual_block_forward.6} parent=0 // loop_pre_header
    _
  $region3: #{residual_block_forward.6} parent=0 // loop_header
    %s9 = sphi 0, %s13
    %p10 = scmp.ge.s32.totalorder %s9, 4
    %s19 = sphi 0, %s21
    %s22 = sphi 0, %s19
    %s23 = sphi 0, %s22
    %s39 = sphi 0, %s23
    %s43 = sphi 0, %s43
    %s45 = sphi 0, %s43
    %s46 = sphi 0, %s45
    %s60 = sphi 0, %s46
    %s64 = sphi 0, %s64
    %s66 = sphi 0, %s64
    %s67 = sphi 0, %s66
    %s81 = sphi 0, %s67
    %s87 = sphi 0, %s89
    %s90 = sphi 0, %s87
    %s91 = sphi 0, %s90
    %s107 = sphi 0, %s91
  $region4: #{residual_block_forward.6} parent=0 // loop_header_branch
    %12 = sbr.rel (%p10) target = $region8
  $region5: #{residual_block_forward.6} parent=0 // loop_body
    %s14 = ssub.s32 %s9, 1
    %s15 = ssub.s32 %s9, 2
    %s16 = sadd.s32 %s9, 1
    %s17 = ssub.s32 %s9, %s16
    %p18 = scmp.eq.s32.totalorder %s17, 0
    %s20 = sadd.s32 %s19, 1
    %s21 = scalar_select %p18, %s19, %s20
    %p24 = pneg %p18
    %p25 = scmp.eq.s32.totalorder %s9, 1
    %p26 = por %p24, %p25
    %p27 = scmp.ne.s32.totalorder %s19, %s22
    %p28 = scmp.eq.s32.totalorder %s9, 0
    %p29 = por %p27, %p28
    %p30 = scmp.ne.s32.totalorder %s19, %s22
    %p31 = scmp.eq.s32.totalorder %s14, 1
    %p32 = por %p30, %p31
    %p33 = scmp.ne.s32.totalorder %s22, %s23
    %p34 = scmp.eq.s32.totalorder %s14, 0
    %p35 = por %p33, %p34
    %p36 = scmp.ne.s32.totalorder %s22, %s23
    %p37 = scmp.eq.s32.totalorder %s15, 1
    %p38 = por %p36, %p37
    %p40 = scmp.ne.s32.totalorder %s23, %s39
    %p41 = scmp.eq.s32.totalorder %s15, 0
    %p42 = por %p40, %p41
    %s44 = sadd.s32 %s43, 1
    %p47 = scmp.eq.s32.totalorder %s9, 1
    %p48 = scmp.ne.s32.totalorder %s43, %s45
    %p49 = scmp.eq.s32.totalorder %s9, 0
    %p50 = por %p48, %p49
    %p51 = scmp.ne.s32.totalorder %s43, %s45
    %p52 = scmp.eq.s32.totalorder %s14, 1
    %p53 = por %p51, %p52
    %p54 = scmp.ne.s32.totalorder %s45, %s46
    %p55 = scmp.eq.s32.totalorder %s14, 0
    %p56 = por %p54, %p55
    %p57 = scmp.ne.s32.totalorder %s45, %s46
    %p58 = scmp.eq.s32.totalorder %s15, 1
    %p59 = por %p57, %p58
    %p61 = scmp.ne.s32.totalorder %s46, %s60
    %p62 = scmp.eq.s32.totalorder %s15, 0
    %p63 = por %p61, %p62
    %s65 = sadd.s32 %s64, 1
    %p68 = scmp.eq.s32.totalorder %s9, 1
    %p69 = scmp.ne.s32.totalorder %s64, %s66
    %p70 = scmp.eq.s32.totalorder %s9, 0
    %p71 = por %p69, %p70
    %p72 = scmp.ne.s32.totalorder %s64, %s66
    %p73 = scmp.eq.s32.totalorder %s14, 1
    %p74 = por %p72, %p73
    %p75 = scmp.ne.s32.totalorder %s66, %s67
    %p76 = scmp.eq.s32.totalorder %s14, 0
    %p77 = por %p75, %p76
    %p78 = scmp.ne.s32.totalorder %s66, %s67
    %p79 = scmp.eq.s32.totalorder %s15, 1
    %p80 = por %p78, %p79
    %p82 = scmp.ne.s32.totalorder %s67, %s81
    %p83 = scmp.eq.s32.totalorder %s15, 0
    %p84 = por %p82, %p83
    %s85 = ssub.s32 %s9, %s16
    %p86 = scmp.eq.s32.totalorder %s85, 0
    %s88 = sadd.s32 %s87, 1
    %s89 = scalar_select %p86, %s87, %s88
    %p92 = pneg %p86
    %p93 = scmp.eq.s32.totalorder %s9, 1
    %p94 = por %p92, %p93
    %p95 = scmp.ne.s32.totalorder %s87, %s90
    %p96 = scmp.eq.s32.totalorder %s9, 0
    %p97 = por %p95, %p96
    %p98 = scmp.ne.s32.totalorder %s87, %s90
    %p99 = scmp.eq.s32.totalorder %s14, 1
    %p100 = por %p98, %p99
    %p101 = scmp.ne.s32.totalorder %s90, %s91
    %p102 = scmp.eq.s32.totalorder %s14, 0
    %p103 = por %p101, %p102
    %p104 = scmp.ne.s32.totalorder %s90, %s91
    %p105 = scmp.eq.s32.totalorder %s15, 1
    %p106 = por %p104, %p105
    %p108 = scmp.ne.s32.totalorder %s91, %s107
    %p109 = scmp.eq.s32.totalorder %s15, 0
    %p110 = por %p108, %p109
    %p111 = scmp.le.s32.totalorder 1, %s9
    %p112 = scmp.lt.s32.totalorder %s9, 3
    %p113 = pnand %p111, %p112
    %p114 = pneg %p113
    // Predicated region
    $region9: #{residual_block_forward.6} parent=5 // pred_check
      _
    $region10: #{residual_block_forward.6} parent=5 // pred_check_branch
      %116 = sbr.rel (%p113) target = $region12
    $region11: #{residual_block_forward.6} parent=5 // pred_region
      %s117 = ssub.s32 %s9, 1
      // Predicated region
      $region13: #{residual_block_forward.6} parent=11 // pred_check
        %p118 = pneg %p56
      $region14: #{residual_block_forward.6} parent=11 // pred_check_branch
        %120 = sbr.rel (%p118) target = $region16
      $region15: #{residual_block_forward.6} parent=11 // pred_region
        _
      $region16: #{residual_block_forward.6} parent=11 // pred_fallthru
        _
      // Predicated region
      $region17: #{residual_block_forward.6} parent=11 // pred_check
        %p121 = pneg %p77
      $region18: #{residual_block_forward.6} parent=11 // pred_check_branch
        %123 = sbr.rel (%p121) target = $region20
      $region19: #{residual_block_forward.6} parent=11 // pred_region
        _
      $region20: #{residual_block_forward.6} parent=11 // pred_fallthru
        _
    $region12: #{residual_block_forward.6} parent=5 // pred_fallthru
      _
    %p124 = scmp.lt.s32.totalorder %s9, 2
    // Predicated region
    $region21: #{residual_block_forward.6} parent=5 // pred_check
      %p125 = pneg %p124
    $region22: #{residual_block_forward.6} parent=5 // pred_check_branch
      %127 = sbr.rel (%p125) target = $region24
    $region23: #{residual_block_forward.6} parent=5 // pred_region
      // Predicated region
      $region25: #{residual_block_forward.6} parent=23 // pred_check
        %p128 = pneg %p29
      $region26: #{residual_block_forward.6} parent=23 // pred_check_branch
        %130 = sbr.rel (%p128) target = $region28
      $region27: #{residual_block_forward.6} parent=23 // pred_region
        %s131 = smul.u32 32, %s9
        %p132 = scmp.lt.s32.totalorder %s131, 63
        %s133 = scalar_select %p132, %s131, 63
        %s134 = smul.addr %s133, 8
        %s135 = scalar_lea.vmem %s0, %s134
        %s136 = smul.u32 32, %s9
      $region28: #{residual_block_forward.6} parent=23 // pred_fallthru
        _
    $region24: #{residual_block_forward.6} parent=5 // pred_fallthru
      _
    %p137 = scmp.le.s32.totalorder 1, %s9
    %p138 = scmp.lt.s32.totalorder %s9, 3
    %p139 = pnand %p137, %p138
    %p140 = pneg %p139
    // Predicated region
    $region29: #{residual_block_forward.6} parent=5 // pred_check
      _
    $region30: #{residual_block_forward.6} parent=5 // pred_check_branch
      %142 = sbr.rel (%p139) target = $region32
    $region31: #{residual_block_forward.6} parent=5 // pred_region
      %s143 = ssub.s32 %s9, 1
      %s144 = smul.u32 32, %s14
      %p145 = scmp.lt.s32.totalorder %s144, 63
      %s146 = scalar_select %p145, %s144, 63
      %s147 = smul.addr %s146, 8
      %s148 = scalar_lea.vmem %s0, %s147
      %p149 = pneg %p35
      %p150 = pneg %p32
      %p151 = pneg %p56
      %p152 = pneg %p53
      %p153 = pneg %p77
      %p154 = pneg %p74
      %p155 = pneg %p103
      %p156 = pneg %p100
      %s157 = smul.u32 32, %s14
      %p158 = scmp.lt.s32.totalorder %s157, 63
      %s159 = scalar_select %p158, %s157, 63
      %s160 = smul.addr %s159, 8
      %s161 = scalar_lea.vmem %s3, %s160
      %s162 = smul.u32 32, %s14
      %p163 = scmp.lt.s32.totalorder %s162, 63
      %s164 = scalar_select %p163, %s162, 63
      %s165 = smul.addr %s164, 8
      %s166 = scalar_lea.vmem %s0, %s165
      %s167 = smul.u32 32, %s14
      %s168 = smul.u32 32, %s14
      %p169 = scmp.lt.s32.totalorder %s168, 63
      %s170 = scalar_select %p169, %s168, 63
      %s171 = smul.addr %s170, 8
      %s172 = scalar_lea.vmem %s3, %s171
      %s173 = smul.u32 32, %s14
      %v174 = vld [vmem:[%s166] sm:$0xff]
      %v175 = vld [vmem:[%s166 + $0x8] sm:$0xff]
      %v176 = vld [vmem:[%s166 + $0x10] sm:$0xff]
      %v177 = vld [vmem:[%s166 + $0x18] sm:$0xff]
      %v178 = vld [vmem:[%s166 + $0x20] sm:$0xff]
      %v179 = vld [vmem:[%s166 + $0x28] sm:$0xff]
      %v180 = vld [vmem:[%s166 + $0x30] sm:$0xff]
      %v181 = vld [vmem:[%s166 + $0x38] sm:$0xff]
      %v182 = vld [vmem:[%s166 + $0x40] sm:$0xff]
      %v183 = vld [vmem:[%s166 + $0x48] sm:$0xff]
      %v184 = vld [vmem:[%s166 + $0x50] sm:$0xff]
      %v185 = vld [vmem:[%s166 + $0x58] sm:$0xff]
      %v186 = vld [vmem:[%s166 + $0x60] sm:$0xff]
      %v187 = vld [vmem:[%s166 + $0x68] sm:$0xff]
      %v188 = vld [vmem:[%s166 + $0x70] sm:$0xff]
      %v189 = vld [vmem:[%s166 + $0x78] sm:$0xff]
      %v190 = vld [vmem:[%s166 + $0x80] sm:$0xff]
      %v191 = vld [vmem:[%s166 + $0x88] sm:$0xff]
      %v192 = vld [vmem:[%s166 + $0x90] sm:$0xff]
      %v193 = vld [vmem:[%s166 + $0x98] sm:$0xff]
      %v194 = vld [vmem:[%s166 + $0xa0] sm:$0xff]
      %v195 = vld [vmem:[%s166 + $0xa8] sm:$0xff]
      %v196 = vld [vmem:[%s166 + $0xb0] sm:$0xff]
      %v197 = vld [vmem:[%s166 + $0xb8] sm:$0xff]
      %v198 = vld [vmem:[%s166 + $0xc0] sm:$0xff]
      %v199 = vld [vmem:[%s166 + $0xc8] sm:$0xff]
      %v200 = vld [vmem:[%s166 + $0xd0] sm:$0xff]
      %v201 = vld [vmem:[%s166 + $0xd8] sm:$0xff]
      %v202 = vld [vmem:[%s166 + $0xe0] sm:$0xff]
      %v203 = vld [vmem:[%s166 + $0xe8] sm:$0xff]
      %v204 = vld [vmem:[%s166 + $0xf0] sm:$0xff]
      %v205 = vld [vmem:[%s166 + $0xf8] sm:$0xff]
      %v206 = vld [vmem:[%s1] sm:$0x1]
      %v208 = vlaneseq
      %v209 = vshrl.u32 %v208, 7
      %v210 = vsub.s32 0, %v209
      %v211 = vrot.slane %v206, %v210
      %v213 = vmul.f32 %v174, %v211
      %v214 = vmul.f32 %v175, %v211
      %v215 = vmul.f32 %v176, %v211
      %v216 = vmul.f32 %v177, %v211
      %v217 = vmul.f32 %v178, %v211
      %v218 = vmul.f32 %v179, %v211
      %v219 = vmul.f32 %v180, %v211
      %v220 = vmul.f32 %v181, %v211
      %v221 = vmul.f32 %v182, %v211
      %v222 = vmul.f32 %v183, %v211
      %v223 = vmul.f32 %v184, %v211
      %v224 = vmul.f32 %v185, %v211
      %v225 = vmul.f32 %v186, %v211
      %v226 = vmul.f32 %v187, %v211
      %v227 = vmul.f32 %v188, %v211
      %v228 = vmul.f32 %v189, %v211
      %v229 = vmul.f32 %v190, %v211
      %v230 = vmul.f32 %v191, %v211
      %v231 = vmul.f32 %v192, %v211
      %v232 = vmul.f32 %v193, %v211
      %v233 = vmul.f32 %v194, %v211
      %v234 = vmul.f32 %v195, %v211
      %v235 = vmul.f32 %v196, %v211
      %v236 = vmul.f32 %v197, %v211
      %v237 = vmul.f32 %v198, %v211
      %v238 = vmul.f32 %v199, %v211
      %v239 = vmul.f32 %v200, %v211
      %v240 = vmul.f32 %v201, %v211
      %v241 = vmul.f32 %v202, %v211
      %v242 = vmul.f32 %v203, %v211
      %v243 = vmul.f32 %v204, %v211
      %v244 = vmul.f32 %v205, %v211
      %v245 = vld [vmem:[%s2] sm:$0x1]
      %v247 = vlaneseq
      %v248 = vshrl.u32 %v247, 7
      %v249 = vsub.s32 0, %v248
      %v250 = vrot.slane %v245, %v249
      %v252 = vadd.f32 %v213, %v250
      %v253 = vadd.f32 %v214, %v250
      %v254 = vadd.f32 %v215, %v250
      %v255 = vadd.f32 %v216, %v250
      %v256 = vadd.f32 %v217, %v250
      %v257 = vadd.f32 %v218, %v250
      %v258 = vadd.f32 %v219, %v250
      %v259 = vadd.f32 %v220, %v250
      %v260 = vadd.f32 %v221, %v250
      %v261 = vadd.f32 %v222, %v250
      %v262 = vadd.f32 %v223, %v250
      %v263 = vadd.f32 %v224, %v250
      %v264 = vadd.f32 %v225, %v250
      %v265 = vadd.f32 %v226, %v250
      %v266 = vadd.f32 %v227, %v250
      %v267 = vadd.f32 %v228, %v250
      %v268 = vadd.f32 %v229, %v250
      %v269 = vadd.f32 %v230, %v250
      %v270 = vadd.f32 %v231, %v250
      %v271 = vadd.f32 %v232, %v250
      %v272 = vadd.f32 %v233, %v250
      %v273 = vadd.f32 %v234, %v250
      %v274 = vadd.f32 %v235, %v250
      %v275 = vadd.f32 %v236, %v250
      %v276 = vadd.f32 %v237, %v250
      %v277 = vadd.f32 %v238, %v250
      %v278 = vadd.f32 %v239, %v250
      %v279 = vadd.f32 %v240, %v250
      %v280 = vadd.f32 %v241, %v250
      %v281 = vadd.f32 %v242, %v250
      %v282 = vadd.f32 %v243, %v250
      %v283 = vadd.f32 %v244, %v250
      %v284 = vmax.f32 %v252, 0.0
      %v285 = vmax.f32 %v253, 0.0
      %v286 = vmax.f32 %v254, 0.0
      %v287 = vmax.f32 %v255, 0.0
      %v288 = vmax.f32 %v256, 0.0
      %v289 = vmax.f32 %v257, 0.0
      %v290 = vmax.f32 %v258, 0.0
      %v291 = vmax.f32 %v259, 0.0
      %v292 = vmax.f32 %v260, 0.0
      %v293 = vmax.f32 %v261, 0.0
      %v294 = vmax.f32 %v262, 0.0
      %v295 = vmax.f32 %v263, 0.0
      %v296 = vmax.f32 %v264, 0.0
      %v297 = vmax.f32 %v265, 0.0
      %v298 = vmax.f32 %v266, 0.0
      %v299 = vmax.f32 %v267, 0.0
      %v300 = vmax.f32 %v268, 0.0
      %v301 = vmax.f32 %v269, 0.0
      %v302 = vmax.f32 %v270, 0.0
      %v303 = vmax.f32 %v271, 0.0
      %v304 = vmax.f32 %v272, 0.0
      %v305 = vmax.f32 %v273, 0.0
      %v306 = vmax.f32 %v274, 0.0
      %v307 = vmax.f32 %v275, 0.0
      %v308 = vmax.f32 %v276, 0.0
      %v309 = vmax.f32 %v277, 0.0
      %v310 = vmax.f32 %v278, 0.0
      %v311 = vmax.f32 %v279, 0.0
      %v312 = vmax.f32 %v280, 0.0
      %v313 = vmax.f32 %v281, 0.0
      %v314 = vmax.f32 %v282, 0.0
      %v315 = vmax.f32 %v283, 0.0
      %316 = vst [vmem:[%s172] sm:$0xff] %v284
      %317 = vst [vmem:[%s172 + $0x8] sm:$0xff] %v285
      %318 = vst [vmem:[%s172 + $0x10] sm:$0xff] %v286
      %319 = vst [vmem:[%s172 + $0x18] sm:$0xff] %v287
      %320 = vst [vmem:[%s172 + $0x20] sm:$0xff] %v288
      %321 = vst [vmem:[%s172 + $0x28] sm:$0xff] %v289
      %322 = vst [vmem:[%s172 + $0x30] sm:$0xff] %v290
      %323 = vst [vmem:[%s172 + $0x38] sm:$0xff] %v291
      %324 = vst [vmem:[%s172 + $0x40] sm:$0xff] %v292
      %325 = vst [vmem:[%s172 + $0x48] sm:$0xff] %v293
      %326 = vst [vmem:[%s172 + $0x50] sm:$0xff] %v294
      %327 = vst [vmem:[%s172 + $0x58] sm:$0xff] %v295
      %328 = vst [vmem:[%s172 + $0x60] sm:$0xff] %v296
      %329 = vst [vmem:[%s172 + $0x68] sm:$0xff] %v297
      %330 = vst [vmem:[%s172 + $0x70] sm:$0xff] %v298
      %331 = vst [vmem:[%s172 + $0x78] sm:$0xff] %v299
      %332 = vst [vmem:[%s172 + $0x80] sm:$0xff] %v300
      %333 = vst [vmem:[%s172 + $0x88] sm:$0xff] %v301
      %334 = vst [vmem:[%s172 + $0x90] sm:$0xff] %v302
      %335 = vst [vmem:[%s172 + $0x98] sm:$0xff] %v303
      %336 = vst [vmem:[%s172 + $0xa0] sm:$0xff] %v304
      %337 = vst [vmem:[%s172 + $0xa8] sm:$0xff] %v305
      %338 = vst [vmem:[%s172 + $0xb0] sm:$0xff] %v306
      %339 = vst [vmem:[%s172 + $0xb8] sm:$0xff] %v307
      %340 = vst [vmem:[%s172 + $0xc0] sm:$0xff] %v308
      %341 = vst [vmem:[%s172 + $0xc8] sm:$0xff] %v309
      %342 = vst [vmem:[%s172 + $0xd0] sm:$0xff] %v310
      %343 = vst [vmem:[%s172 + $0xd8] sm:$0xff] %v311
      %344 = vst [vmem:[%s172 + $0xe0] sm:$0xff] %v312
      %345 = vst [vmem:[%s172 + $0xe8] sm:$0xff] %v313
      %346 = vst [vmem:[%s172 + $0xf0] sm:$0xff] %v314
      %347 = vst [vmem:[%s172 + $0xf8] sm:$0xff] %v315
      %s348 = smul.u32 32, %s14
      %p349 = scmp.lt.s32.totalorder %s348, 63
      %s350 = scalar_select %p349, %s348, 63
      %s351 = smul.addr %s350, 8
      %s352 = scalar_lea.vmem %s3, %s351
      // Predicated region
      $region33: #{residual_block_forward.6} parent=31 // pred_check
        %p353 = pneg %p100
      $region34: #{residual_block_forward.6} parent=31 // pred_check_branch
        %355 = sbr.rel (%p353) target = $region36
      $region35: #{residual_block_forward.6} parent=31 // pred_region
        %s356 = smul.u32 32, %s14
      $region36: #{residual_block_forward.6} parent=31 // pred_fallthru
        _
    $region32: #{residual_block_forward.6} parent=5 // pred_fallthru
      _
    %p357 = scmp.le.s32.totalorder 2, %s9
    // Predicated region
    $region37: #{residual_block_forward.6} parent=5 // pred_check
      %p358 = pneg %p357
    $region38: #{residual_block_forward.6} parent=5 // pred_check_branch
      %360 = sbr.rel (%p358) target = $region40
    $region39: #{residual_block_forward.6} parent=5 // pred_region
      %s361 = ssub.s32 %s9, 2
      // Predicated region
      $region41: #{residual_block_forward.6} parent=39 // pred_check
        %p362 = pneg %p106
      $region42: #{residual_block_forward.6} parent=39 // pred_check_branch
        %364 = sbr.rel (%p362) target = $region44
      $region43: #{residual_block_forward.6} parent=39 // pred_region
        %s365 = smul.u32 32, %s15
        %p366 = scmp.lt.s32.totalorder %s365, 63
        %s367 = scalar_select %p366, %s365, 63
        %s368 = smul.addr %s367, 8
        %s369 = scalar_lea.vmem %s3, %s368
      $region44: #{residual_block_forward.6} parent=39 // pred_fallthru
        _
    $region40: #{residual_block_forward.6} parent=5 // pred_fallthru
      _
  $region6: #{residual_block_forward.6} parent=0 // loop_footer
    %s13 = sadd.s32 1, %s9
  $region7: #{residual_block_forward.6} parent=0 // loop_footer_branch
    %8 = sbr.rel target = $region3
  $region8: #{residual_block_forward.6} parent=0 // loop_exit
    _

// kernel: residual_block_forward.5
$region0: #{residual_block_forward.5}
  #allocation0 [shape = 'u32[]', space=smem, size = 0x4, offset = 0x4, fixed_abs, tag = 'smem constant byte address 0x4 - core index']
  #allocation1 [shape = 'u32[144,128]{1,0:T(1,128)}', space=vmem, size = 0x12000, scoped, tag = 'internal scratch']
  #allocation2 [shape = 'f32[256,128]{1,0:T(8,128)}', space=vmem, size = 0x20000, scoped, tag = 'scratch operand']
  %s0 = inlined_call_operand.vmem [shape: f32[512,128], index: 0, kind: input, shape index: {}]
  %s1 = inlined_call_operand.vmem [shape: f32[128,128], index: 1, kind: input, shape index: {}]
  %s2 = inlined_call_operand.vmem [shape: f32[1,128], index: 2, kind: input, shape index: {}]
  %s3 = inlined_call_operand.vmem [shape: f32[512,128], index: 3, kind: output, shape index: {0}]
  %s4 = inlined_call_operand.vmem [shape: f32[2,2,128], index: 4, kind: output, shape index: {1}]
  %5 = xla_tuple %s3, %s4
  %s6 = sld [smem:[#allocation0]]
  $region61: #{residual_block_forward.5} parent=0
    _
  %s8 = ssub.s32 1, %s6
  %s9 = scalar_select 0, %s8, %s6
  loop: start=0, step=1, limit=4
  $region2: #{residual_block_forward.5} parent=0 // loop_pre_header
    _
  $region3: #{residual_block_forward.5} parent=0 // loop_header
    %s11 = sphi 0, %s15
    %p12 = scmp.ge.s32.totalorder %s11, 4
    %s18 = sphi 0, %s30
    %s19 = sphi 0, %s26
    %s20 = sphi 0, %s18
    %s21 = sphi 0, %s19
    %s22 = sphi 0, %s20
    %s23 = sphi 0, %s21
    %s35 = sphi 0, %s37
    %s38 = sphi 0, %s35
    %s39 = sphi 0, %s38
    %s55 = sphi 0, %s39
    %s61 = sphi 0, %s63
    %s64 = sphi 0, %s61
    %s65 = sphi 0, %s64
    %s81 = sphi 0, %s65
    %s85 = sphi 0, %s85
    %s87 = sphi 0, %s85
    %s88 = sphi 0, %s87
    %s102 = sphi 0, %s88
    %s108 = sphi 0, %s110
    %s111 = sphi 0, %s108
    %s112 = sphi 0, %s111
    %s128 = sphi 0, %s112
    %s134 = sphi 0, %s136
    %s137 = sphi 0, %s134
    %s138 = sphi 0, %s137
    %s154 = sphi 0, %s138
  $region4: #{residual_block_forward.5} parent=0 // loop_header_branch
    %14 = sbr.rel (%p12) target = $region8
  $region5: #{residual_block_forward.5} parent=0 // loop_body
    %s16 = ssub.s32 %s11, 1
    %s17 = ssub.s32 %s11, 2
    %s24 = sadd.s32 1, %s19
    %p25 = scmp.ge.s32.totalorder %s24, 1
    %s26 = scalar_select %p25, 0, %s24
    %s27 = sadd.s32 1, %s18
    %s28 = scalar_select %p25, %s27, %s18
    %p29 = scmp.ge.s32.totalorder %s28, 2
    %s30 = scalar_select %p29, 0, %s28
    %s31 = ssub.s32 %s18, %s30
    %s32 = ssub.s32 %s19, %s26
    %s33 = sor.u32 %s31, %s32
    %p34 = scmp.eq.s32.totalorder %s33, 0
    %s36 = sadd.s32 %s35, 1
    %s37 = scalar_select %p34, %s35, %s36
    %p40 = pneg %p34
    %p41 = scmp.eq.s32.totalorder %s11, 1
    %p42 = por %p40, %p41
    %p43 = scmp.ne.s32.totalorder %s35, %s38
    %p44 = scmp.eq.s32.totalorder %s11, 0
    %p45 = por %p43, %p44
    %p46 = scmp.ne.s32.totalorder %s35, %s38
    %p47 = scmp.eq.s32.totalorder %s16, 1
    %p48 = por %p46, %p47
    %p49 = scmp.ne.s32.totalorder %s38, %s39
    %p50 = scmp.eq.s32.totalorder %s16, 0
    %p51 = por %p49, %p50
    %p52 = scmp.ne.s32.totalorder %s38, %s39
    %p53 = scmp.eq.s32.totalorder %s17, 1
    %p54 = por %p52, %p53
    %p56 = scmp.ne.s32.totalorder %s39, %s55
    %p57 = scmp.eq.s32.totalorder %s17, 0
    %p58 = por %p56, %p57
    %s59 = ssub.s32 %s19, %s26
    %p60 = scmp.eq.s32.totalorder %s59, 0
    %s62 = sadd.s32 %s61, 1
    %s63 = scalar_select %p60, %s61, %s62
    %p66 = pneg %p60
    %p67 = scmp.eq.s32.totalorder %s11, 1
    %p68 = por %p66, %p67
    %p69 = scmp.ne.s32.totalorder %s61, %s64
    %p70 = scmp.eq.s32.totalorder %s11, 0
    %p71 = por %p69, %p70
    %p72 = scmp.ne.s32.totalorder %s61, %s64
    %p73 = scmp.eq.s32.totalorder %s16, 1
    %p74 = por %p72, %p73
    %p75 = scmp.ne.s32.totalorder %s64, %s65
    %p76 = scmp.eq.s32.totalorder %s16, 0
    %p77 = por %p75, %p76
    %p78 = scmp.ne.s32.totalorder %s64, %s65
    %p79 = scmp.eq.s32.totalorder %s17, 1
    %p80 = por %p78, %p79
    %p82 = scmp.ne.s32.totalorder %s65, %s81
    %p83 = scmp.eq.s32.totalorder %s17, 0
    %p84 = por %p82, %p83
    %s86 = sadd.s32 %s85, 1
    %p89 = scmp.eq.s32.totalorder %s11, 1
    %p90 = scmp.ne.s32.totalorder %s85, %s87
    %p91 = scmp.eq.s32.totalorder %s11, 0
    %p92 = por %p90, %p91
    %p93 = scmp.ne.s32.totalorder %s85, %s87
    %p94 = scmp.eq.s32.totalorder %s16, 1
    %p95 = por %p93, %p94
    %p96 = scmp.ne.s32.totalorder %s87, %s88
    %p97 = scmp.eq.s32.totalorder %s16, 0
    %p98 = por %p96, %p97
    %p99 = scmp.ne.s32.totalorder %s87, %s88
    %p100 = scmp.eq.s32.totalorder %s17, 1
    %p101 = por %p99, %p100
    %p103 = scmp.ne.s32.totalorder %s88, %s102
    %p104 = scmp.eq.s32.totalorder %s17, 0
    %p105 = por %p103, %p104
    %s106 = ssub.s32 %s18, %s30
    %p107 = scmp.eq.s32.totalorder %s106, 0
    %s109 = sadd.s32 %s108, 1
    %s110 = scalar_select %p107, %s108, %s109
    %p113 = pneg %p107
    %p114 = scmp.eq.s32.totalorder %s11, 1
    %p115 = por %p113, %p114
    %p116 = scmp.ne.s32.totalorder %s108, %s111
    %p117 = scmp.eq.s32.totalorder %s11, 0
    %p118 = por %p116, %p117
    %p119 = scmp.ne.s32.totalorder %s108, %s111
    %p120 = scmp.eq.s32.totalorder %s16, 1
    %p121 = por %p119, %p120
    %p122 = scmp.ne.s32.totalorder %s111, %s112
    %p123 = scmp.eq.s32.totalorder %s16, 0
    %p124 = por %p122, %p123
    %p125 = scmp.ne.s32.totalorder %s111, %s112
    %p126 = scmp.eq.s32.totalorder %s17, 1
    %p127 = por %p125, %p126
    %p129 = scmp.ne.s32.totalorder %s112, %s128
    %p130 = scmp.eq.s32.totalorder %s17, 0
    %p131 = por %p129, %p130
    %s132 = ssub.s32 %s18, %s30
    %p133 = scmp.eq.s32.totalorder %s132, 0
    %s135 = sadd.s32 %s134, 1
    %s136 = scalar_select %p133, %s134, %s135
    %p139 = pneg %p133
    %p140 = scmp.eq.s32.totalorder %s11, 1
    %p141 = por %p139, %p140
    %p142 = scmp.ne.s32.totalorder %s134, %s137
    %p143 = scmp.eq.s32.totalorder %s11, 0
    %p144 = por %p142, %p143
    %p145 = scmp.ne.s32.totalorder %s134, %s137
    %p146 = scmp.eq.s32.totalorder %s16, 1
    %p147 = por %p145, %p146
    %p148 = scmp.ne.s32.totalorder %s137, %s138
    %p149 = scmp.eq.s32.totalorder %s16, 0
    %p150 = por %p148, %p149
    %p151 = scmp.ne.s32.totalorder %s137, %s138
    %p152 = scmp.eq.s32.totalorder %s17, 1
    %p153 = por %p151, %p152
    %p155 = scmp.ne.s32.totalorder %s138, %s154
    %p156 = scmp.eq.s32.totalorder %s17, 0
    %p157 = por %p155, %p156
    %p158 = scmp.le.s32.totalorder 1, %s11
    %p159 = scmp.lt.s32.totalorder %s11, 3
    %p160 = pnand %p158, %p159
    %p161 = pneg %p160
    // Predicated region
    $region9: #{residual_block_forward.5} parent=5 // pred_check
      _
    $region10: #{residual_block_forward.5} parent=5 // pred_check_branch
      %163 = sbr.rel (%p160) target = $region12
    $region11: #{residual_block_forward.5} parent=5 // pred_region
      %s164 = ssub.s32 %s11, 1
      // Predicated region
      $region13: #{residual_block_forward.5} parent=11 // pred_check
        %p165 = pneg %p77
      $region14: #{residual_block_forward.5} parent=11 // pred_check_branch
        %167 = sbr.rel (%p165) target = $region16
      $region15: #{residual_block_forward.5} parent=11 // pred_region
        %s168 = smul.u32 16, %s21
        %p169 = scmp.lt.s32.totalorder %s168, 15
        %s170 = scalar_select %p169, %s168, 15
        %s171 = smul.addr %s170, 8
        %s172 = scalar_lea.vmem %s1, %s171
        %s173 = smul.u32 16, %s21
      $region16: #{residual_block_forward.5} parent=11 // pred_fallthru
        _
      // Predicated region
      $region17: #{residual_block_forward.5} parent=11 // pred_check
        %p174 = pneg %p98
      $region18: #{residual_block_forward.5} parent=11 // pred_check_branch
        %176 = sbr.rel (%p174) target = $region20
      $region19: #{residual_block_forward.5} parent=11 // pred_region
        _
      $region20: #{residual_block_forward.5} parent=11 // pred_fallthru
        _
    $region12: #{residual_block_forward.5} parent=5 // pred_fallthru
      _
    %p177 = scmp.lt.s32.totalorder %s11, 2
    // Predicated region
    $region21: #{residual_block_forward.5} parent=5 // pred_check
      %p178 = pneg %p177
    $region22: #{residual_block_forward.5} parent=5 // pred_check_branch
      %180 = sbr.rel (%p178) target = $region24
    $region23: #{residual_block_forward.5} parent=5 // pred_region
      // Predicated region
      $region25: #{residual_block_forward.5} parent=23 // pred_check
        %p181 = pneg %p45
      $region26: #{residual_block_forward.5} parent=23 // pred_check_branch
        %183 = sbr.rel (%p181) target = $region28
      $region27: #{residual_block_forward.5} parent=23 // pred_region
        %s184 = smul.u32 32, %s18
        %p185 = scmp.lt.s32.totalorder %s184, 63
        %s186 = scalar_select %p185, %s184, 63
        %p187 = scmp.lt.s32.totalorder %s19, 0
        %s188 = scalar_select %p187, %s19, 0
        %s189 = sadd.s32 %s188, %s186
        %s190 = smul.addr %s189, 8
        %s191 = scalar_lea.vmem %s0, %s190
        %s192 = smul.u32 32, %s18
      $region28: #{residual_block_forward.5} parent=23 // pred_fallthru
        _
    $region24: #{residual_block_forward.5} parent=5 // pred_fallthru
      _
    %p193 = scmp.le.s32.totalorder 1, %s11
    %p194 = scmp.lt.s32.totalorder %s11, 3
    %p195 = pnand %p193, %p194
    %p196 = pneg %p195
    // Predicated region
    $region29: #{residual_block_forward.5} parent=5 // pred_check
      _
    $region30: #{residual_block_forward.5} parent=5 // pred_check_branch
      %198 = sbr.rel (%p195) target = $region32
    $region31: #{residual_block_forward.5} parent=5 // pred_region
      %s199 = ssub.s32 %s11, 1
      %s200 = smul.u32 32, %s20
      %p201 = scmp.lt.s32.totalorder %s200, 63
      %s202 = scalar_select %p201, %s200, 63
      %p203 = scmp.lt.s32.totalorder %s21, 0
      %s204 = scalar_select %p203, %s21, 0
      %s205 = sadd.s32 %s204, %s202
      %s206 = smul.addr %s205, 8
      %s207 = scalar_lea.vmem %s0, %s206
      %p208 = pneg %p51
      %p209 = pneg %p48
      %s210 = smul.u32 16, %s21
      %p211 = scmp.lt.s32.totalorder %s210, 15
      %s212 = scalar_select %p211, %s210, 15
      %s213 = smul.addr %s212, 8
      %s214 = scalar_lea.vmem %s1, %s213
      %p215 = pneg %p77
      %p216 = pneg %p74
      %p217 = pneg %p98
      %p218 = pneg %p95
      %p219 = pneg %p124
      %p220 = pneg %p121
      %s221 = smul.u32 32, %s20
      %p222 = scmp.lt.s32.totalorder %s221, 63
      %s223 = scalar_select %p222, %s221, 63
      %s224 = smul.addr %s223, 8
      %s225 = scalar_lea.vmem %s3, %s224
      %p226 = pneg %p150
      %p227 = pneg %p147
      %p228 = scmp.lt.s32.totalorder %s20, 1
      %s229 = scalar_select %p228, %s20, 1
      %s230 = smul.addr %s229, 2
      %s231 = scalar_lea.vmem %s4, %s230
      %s232 = smul.u32 32, %s20
      %p233 = scmp.lt.s32.totalorder %s232, 63
      %s234 = scalar_select %p233, %s232, 63
      %p235 = scmp.lt.s32.totalorder %s21, 0
      %s236 = scalar_select %p235, %s21, 0
      %s237 = sadd.s32 %s236, %s234
      %s238 = smul.addr %s237, 8
      %s239 = scalar_lea.vmem %s0, %s238
      %s240 = smul.u32 32, %s20
      %s241 = smul.u32 16, %s21
      %p242 = scmp.lt.s32.totalorder %s241, 15
      %s243 = scalar_select %p242, %s241, 15
      %s244 = smul.addr %s243, 8
      %s245 = scalar_lea.vmem %s1, %s244
      %s246 = smul.u32 16, %s21
      %s247 = smul.u32 32, %s20
      %p248 = scmp.lt.s32.totalorder %s247, 63
      %s249 = scalar_select %p248, %s247, 63
      %s250 = smul.addr %s249, 8
      %s251 = scalar_lea.vmem %s3, %s250
      %s252 = smul.u32 32, %s20
      %p253 = scmp.lt.s32.totalorder %s20, 1
      %s254 = scalar_select %p253, %s20, 1
      %s255 = smul.addr %s254, 2
      %s256 = scalar_lea.vmem %s4, %s255
      %p257 = scmp.eq.s32.totalorder %s21, 0
      // Predicated region
      $region33: #{residual_block_forward.5} parent=31 // pred_check
        %p258 = pneg %p257
      $region34: #{residual_block_forward.5} parent=31 // pred_check_branch
        %260 = sbr.rel (%p258) target = $region36
      $region35: #{residual_block_forward.5} parent=31 // pred_region
        %261 = vst [vmem:[#allocation2] sm:$0xff] 0.0
        %262 = vst [vmem:[#allocation2 + $0x8] sm:$0xff] 0.0
        %263 = vst [vmem:[#allocation2 + $0x10] sm:$0xff] 0.0
        %264 = vst [vmem:[#allocation2 + $0x18] sm:$0xff] 0.0
        %265 = vst [vmem:[#allocation2 + $0x20] sm:$0xff] 0.0
        %266 = vst [vmem:[#allocation2 + $0x28] sm:$0xff] 0.0
        %267 = vst [vmem:[#allocation2 + $0x30] sm:$0xff] 0.0
        %268 = vst [vmem:[#allocation2 + $0x38] sm:$0xff] 0.0
        %269 = vst [vmem:[#allocation2 + $0x40] sm:$0xff] 0.0
        %270 = vst [vmem:[#allocation2 + $0x48] sm:$0xff] 0.0
        %271 = vst [vmem:[#allocation2 + $0x50] sm:$0xff] 0.0
        %272 = vst [vmem:[#allocation2 + $0x58] sm:$0xff] 0.0
        %273 = vst [vmem:[#allocation2 + $0x60] sm:$0xff] 0.0
        %274 = vst [vmem:[#allocation2 + $0x68] sm:$0xff] 0.0
        %275 = vst [vmem:[#allocation2 + $0x70] sm:$0xff] 0.0
        %276 = vst [vmem:[#allocation2 + $0x78] sm:$0xff] 0.0
        %277 = vst [vmem:[#allocation2 + $0x80] sm:$0xff] 0.0
        %278 = vst [vmem:[#allocation2 + $0x88] sm:$0xff] 0.0
        %279 = vst [vmem:[#allocation2 + $0x90] sm:$0xff] 0.0
        %280 = vst [vmem:[#allocation2 + $0x98] sm:$0xff] 0.0
        %281 = vst [vmem:[#allocation2 + $0xa0] sm:$0xff] 0.0
        %282 = vst [vmem:[#allocation2 + $0xa8] sm:$0xff] 0.0
        %283 = vst [vmem:[#allocation2 + $0xb0] sm:$0xff] 0.0
        %284 = vst [vmem:[#allocation2 + $0xb8] sm:$0xff] 0.0
        %285 = vst [vmem:[#allocation2 + $0xc0] sm:$0xff] 0.0
        %286 = vst [vmem:[#allocation2 + $0xc8] sm:$0xff] 0.0
        %287 = vst [vmem:[#allocation2 + $0xd0] sm:$0xff] 0.0
        %288 = vst [vmem:[#allocation2 + $0xd8] sm:$0xff] 0.0
        %289 = vst [vmem:[#allocation2 + $0xe0] sm:$0xff] 0.0
        %290 = vst [vmem:[#allocation2 + $0xe8] sm:$0xff] 0.0
        %291 = vst [vmem:[#allocation2 + $0xf0] sm:$0xff] 0.0
        %292 = vst [vmem:[#allocation2 + $0xf8] sm:$0xff] 0.0
      $region36: #{residual_block_forward.5} parent=31 // pred_fallthru
        _
      %v293 = vld [vmem:[#allocation2] sm:$0xff]
      %v294 = vld [vmem:[#allocation2 + $0x8] sm:$0xff]
      %v295 = vld [vmem:[#allocation2 + $0x10] sm:$0xff]
      %v296 = vld [vmem:[#allocation2 + $0x18] sm:$0xff]
      %v297 = vld [vmem:[#allocation2 + $0x20] sm:$0xff]
      %v298 = vld [vmem:[#allocation2 + $0x28] sm:$0xff]
      %v299 = vld [vmem:[#allocation2 + $0x30] sm:$0xff]
      %v300 = vld [vmem:[#allocation2 + $0x38] sm:$0xff]
      %v301 = vld [vmem:[#allocation2 + $0x40] sm:$0xff]
      %v302 = vld [vmem:[#allocation2 + $0x48] sm:$0xff]
      %v303 = vld [vmem:[#allocation2 + $0x50] sm:$0xff]
      %v304 = vld [vmem:[#allocation2 + $0x58] sm:$0xff]
      %v305 = vld [vmem:[#allocation2 + $0x60] sm:$0xff]
      %v306 = vld [vmem:[#allocation2 + $0x68] sm:$0xff]
      %v307 = vld [vmem:[#allocation2 + $0x70] sm:$0xff]
      %v308 = vld [vmem:[#allocation2 + $0x78] sm:$0xff]
      %v309 = vld [vmem:[#allocation2 + $0x80] sm:$0xff]
      %v310 = vld [vmem:[#allocation2 + $0x88] sm:$0xff]
      %v311 = vld [vmem:[#allocation2 + $0x90] sm:$0xff]
      %v312 = vld [vmem:[#allocation2 + $0x98] sm:$0xff]
      %v313 = vld [vmem:[#allocation2 + $0xa0] sm:$0xff]
      %v314 = vld [vmem:[#allocation2 + $0xa8] sm:$0xff]
      %v315 = vld [vmem:[#allocation2 + $0xb0] sm:$0xff]
      %v316 = vld [vmem:[#allocation2 + $0xb8] sm:$0xff]
      %v317 = vld [vmem:[#allocation2 + $0xc0] sm:$0xff]
      %v318 = vld [vmem:[#allocation2 + $0xc8] sm:$0xff]
      %v319 = vld [vmem:[#allocation2 + $0xd0] sm:$0xff]
      %v320 = vld [vmem:[#allocation2 + $0xd8] sm:$0xff]
      %v321 = vld [vmem:[#allocation2 + $0xe0] sm:$0xff]
      %v322 = vld [vmem:[#allocation2 + $0xe8] sm:$0xff]
      %v323 = vld [vmem:[#allocation2 + $0xf0] sm:$0xff]
      %v324 = vld [vmem:[#allocation2 + $0xf8] sm:$0xff]
      %v325 = vld [vmem:[%s239] sm:$0xff]
      %v326 = vld [vmem:[%s239 + $0x8] sm:$0xff]
      %v327 = vld [vmem:[%s239 + $0x10] sm:$0xff]
      %v328 = vld [vmem:[%s239 + $0x18] sm:$0xff]
      %v329 = vld [vmem:[%s239 + $0x20] sm:$0xff]
      %v330 = vld [vmem:[%s239 + $0x28] sm:$0xff]
      %v331 = vld [vmem:[%s239 + $0x30] sm:$0xff]
      %v332 = vld [vmem:[%s239 + $0x38] sm:$0xff]
      %v333 = vld [vmem:[%s239 + $0x40] sm:$0xff]
      %v334 = vld [vmem:[%s239 + $0x48] sm:$0xff]
      %v335 = vld [vmem:[%s239 + $0x50] sm:$0xff]
      %v336 = vld [vmem:[%s239 + $0x58] sm:$0xff]
      %v337 = vld [vmem:[%s239 + $0x60] sm:$0xff]
      %v338 = vld [vmem:[%s239 + $0x68] sm:$0xff]
      %v339 = vld [vmem:[%s239 + $0x70] sm:$0xff]
      %v340 = vld [vmem:[%s239 + $0x78] sm:$0xff]
      %v341 = vld [vmem:[%s239 + $0x80] sm:$0xff]
      %v342 = vld [vmem:[%s239 + $0x88] sm:$0xff]
      %v343 = vld [vmem:[%s239 + $0x90] sm:$0xff]
      %v344 = vld [vmem:[%s239 + $0x98] sm:$0xff]
      %v345 = vld [vmem:[%s239 + $0xa0] sm:$0xff]
      %v346 = vld [vmem:[%s239 + $0xa8] sm:$0xff]
      %v347 = vld [vmem:[%s239 + $0xb0] sm:$0xff]
      %v348 = vld [vmem:[%s239 + $0xb8] sm:$0xff]
      %v349 = vld [vmem:[%s239 + $0xc0] sm:$0xff]
      %v350 = vld [vmem:[%s239 + $0xc8] sm:$0xff]
      %v351 = vld [vmem:[%s239 + $0xd0] sm:$0xff]
      %v352 = vld [vmem:[%s239 + $0xd8] sm:$0xff]
      %v353 = vld [vmem:[%s239 + $0xe0] sm:$0xff]
      %v354 = vld [vmem:[%s239 + $0xe8] sm:$0xff]
      %v355 = vld [vmem:[%s239 + $0xf0] sm:$0xff]
      %v356 = vld [vmem:[%s239 + $0xf8] sm:$0xff]
      %v357 = vld [vmem:[%s245] sm:$0xff]
      %v358 = vld [vmem:[%s245 + $0x8] sm:$0xff]
      %v359 = vld [vmem:[%s245 + $0x10] sm:$0xff]
      %v360 = vld [vmem:[%s245 + $0x18] sm:$0xff]
      %v361 = vld [vmem:[%s245 + $0x20] sm:$0xff]
      %v362 = vld [vmem:[%s245 + $0x28] sm:$0xff]
      %v363 = vld [vmem:[%s245 + $0x30] sm:$0xff]
      %v364 = vld [vmem:[%s245 + $0x38] sm:$0xff]
      %v365 = vld [vmem:[%s245 + $0x40] sm:$0xff]
      %v366 = vld [vmem:[%s245 + $0x48] sm:$0xff]
      %v367 = vld [vmem:[%s245 + $0x50] sm:$0xff]
      %v368 = vld [vmem:[%s245 + $0x58] sm:$0xff]
      %v369 = vld [vmem:[%s245 + $0x60] sm:$0xff]
      %v370 = vld [vmem:[%s245 + $0x68] sm:$0xff]
      %v371 = vld [vmem:[%s245 + $0x70] sm:$0xff]
      %v372 = vld [vmem:[%s245 + $0x78] sm:$0xff]
      %373 = vmatprep.subr.mxu0 0.0
      %374 = vmatpush1.msra.mxu0 %v372
      %375 = vmatprep.subr.mxu0 0.0
      %376 = vmatpush1.msra.mxu0 %v371
      %377 = vmatprep.subr.mxu0 0.0
      %378 = vmatpush1.msra.mxu0 %v370
      %379 = vmatprep.subr.mxu0 0.0
      %380 = vmatpush1.msra.mxu0 %v369
      %381 = vmatprep.subr.mxu0 0.0
      %382 = vmatpush1.msra.mxu0 %v368
      %383 = vmatprep.subr.mxu0 0.0
      %384 = vmatpush1.msra.mxu0 %v367
      %385 = vmatprep.subr.mxu0 0.0
      %386 = vmatpush1.msra.mxu0 %v366
      %387 = vmatprep.subr.mxu0 0.0
      %388 = vmatpush1.msra.mxu0 %v365
      %389 = vmatprep.subr.mxu0 0.0
      %390 = vmatpush1.msra.mxu0 %v364
      %391 = vmatprep.subr.mxu0 0.0
      %392 = vmatpush1.msra.mxu0 %v363
      %393 = vmatprep.subr.mxu0 0.0
      %394 = vmatpush1.msra.mxu0 %v362
      %395 = vmatprep.subr.mxu0 0.0
      %396 = vmatpush1.msra.mxu0 %v361
      %397 = vmatprep.subr.mxu0 0.0
      %398 = vmatpush1.msra.mxu0 %v360
      %399 = vmatprep.subr.mxu0 0.0
      %400 = vmatpush1.msra.mxu0 %v359
      %401 = vmatprep.subr.mxu0 0.0
      %402 = vmatpush1.msra.mxu0 %v358
      %403 = vmatprep.subr.mxu0 0.0
      %404 = vmatpush1.msra.mxu0 %v357
      %405 = vmatprep.subr.mxu0 0.0
      %406 = vmatpush2.msra.mxu0 0.0
      %407 = vmatprep.subr.mxu0 0.0
      %408 = vmatpush2.msra.mxu0 0.0
      %409 = vmatprep.subr.mxu0 0.0
      %410 = vmatpush2.msra.mxu0 0.0
      %411 = vmatprep.subr.mxu0 0.0
      %412 = vmatpush2.msra.mxu0 0.0
      %413 = vmatprep.subr.mxu0 0.0
      %414 = vmatpush2.msra.mxu0 0.0
      %415 = vmatprep.subr.mxu0 0.0
      %416 = vmatpush2.msra.mxu0 0.0
      %417 = vmatprep.subr.mxu0 0.0
      %418 = vmatpush2.msra.mxu0 0.0
      %419 = vmatprep.subr.mxu0 0.0
      %420 = vmatpush2.msra.mxu0 0.0
      %421 = vmatprep.subr.mxu0 0.0
      %422 = vmatpush2.msra.mxu0 0.0
      %423 = vmatprep.subr.mxu0 0.0
      %424 = vmatpush2.msra.mxu0 0.0
      %425 = vmatprep.subr.mxu0 0.0
      %426 = vmatpush2.msra.mxu0 0.0
      %427 = vmatprep.subr.mxu0 0.0
      %428 = vmatpush2.msra.mxu0 0.0
      %429 = vmatprep.subr.mxu0 0.0
      %430 = vmatpush2.msra.mxu0 0.0
      %431 = vmatprep.subr.mxu0 0.0
      %432 = vmatpush2.msra.mxu0 0.0
      %433 = vmatprep.subr.mxu0 0.0
      %434 = vmatpush2.msra.mxu0 0.0
      %435 = vmatprep.subr.mxu0 0.0
      %436 = vmatpush2.msra.mxu0 0.0
      %437 = vmatprep.mubr.f32.mxu0 0.0
      %438 = vmatmul.mubr.f32.gmra.mxu0 %v325
      %v439 = vpop.f32.mrf.mxu0
      %v440 = vadd.f32 0.0, %v439
      %v441 = vpop.f32.mrf.mxu0
      %442 = vmatprep.mubr.f32.mxu0 0.0
      %443 = vmatmul.mubr.f32.gmra.mxu0 %v326
      %v444 = vpop.f32.mrf.mxu0
      %v445 = vadd.f32 0.0, %v444
      %v446 = vpop.f32.mrf.mxu0
      %447 = vmatprep.mubr.f32.mxu0 0.0
      %448 = vmatmul.mubr.f32.gmra.mxu0 %v327
      %v449 = vpop.f32.mrf.mxu0
      %v450 = vadd.f32 0.0, %v449
      %v451 = vpop.f32.mrf.mxu0
      %452 = vmatprep.mubr.f32.mxu0 0.0
      %453 = vmatmul.mubr.f32.gmra.mxu0 %v328
      %v454 = vpop.f32.mrf.mxu0
      %v455 = vadd.f32 0.0, %v454
      %v456 = vpop.f32.mrf.mxu0
      %457 = vmatprep.mubr.f32.mxu0 0.0
      %458 = vmatmul.mubr.f32.gmra.mxu0 %v329
      %v459 = vpop.f32.mrf.mxu0
      %v460 = vadd.f32 0.0, %v459
      %v461 = vpop.f32.mrf.mxu0
      %462 = vmatprep.mubr.f32.mxu0 0.0
      %463 = vmatmul.mubr.f32.gmra.mxu0 %v330
      %v464 = vpop.f32.mrf.mxu0
      %v465 = vadd.f32 0.0, %v464
      %v466 = vpop.f32.mrf.mxu0
      %467 = vmatprep.mubr.f32.mxu0 0.0
      %468 = vmatmul.mubr.f32.gmra.mxu0 %v331
      %v469 = vpop.f32.mrf.mxu0
      %v470 = vadd.f32 0.0, %v469
      %v471 = vpop.f32.mrf.mxu0
      %472 = vmatprep.mubr.f32.mxu0 0.0
      %473 = vmatmul.mubr.f32.gmra.mxu0 %v332
      %v474 = vpop.f32.mrf.mxu0
      %v475 = vadd.f32 0.0, %v474
      %v476 = vpop.f32.mrf.mxu0
      %477 = vmatprep.mubr.f32.mxu0 0.0
      %478 = vmatmul.mubr.f32.gmra.mxu0 %v333
      %v479 = vpop.f32.mrf.mxu0
      %v480 = vadd.f32 0.0, %v479
      %v481 = vpop.f32.mrf.mxu0
      %482 = vmatprep.mubr.f32.mxu0 0.0
      %483 = vmatmul.mubr.f32.gmra.mxu0 %v334
      %v484 = vpop.f32.mrf.mxu0
      %v485 = vadd.f32 0.0, %v484
      %v486 = vpop.f32.mrf.mxu0
      %487 = vmatprep.mubr.f32.mxu0 0.0
      %488 = vmatmul.mubr.f32.gmra.mxu0 %v335
      %v489 = vpop.f32.mrf.mxu0
      %v490 = vadd.f32 0.0, %v489
      %v491 = vpop.f32.mrf.mxu0
      %492 = vmatprep.mubr.f32.mxu0 0.0
      %493 = vmatmul.mubr.f32.gmra.mxu0 %v336
      %v494 = vpop.f32.mrf.mxu0
      %v495 = vadd.f32 0.0, %v494
      %v496 = vpop.f32.mrf.mxu0
      %497 = vmatprep.mubr.f32.mxu0 0.0
      %498 = vmatmul.mubr.f32.gmra.mxu0 %v337
      %v499 = vpop.f32.mrf.mxu0
      %v500 = vadd.f32 0.0, %v499
      %v501 = vpop.f32.mrf.mxu0
      %502 = vmatprep.mubr.f32.mxu0 0.0
      %503 = vmatmul.mubr.f32.gmra.mxu0 %v338
      %v504 = vpop.f32.mrf.mxu0
      %v505 = vadd.f32 0.0, %v504
      %v506 = vpop.f32.mrf.mxu0
      %507 = vmatprep.mubr.f32.mxu0 0.0
      %508 = vmatmul.mubr.f32.gmra.mxu0 %v339
      %v509 = vpop.f32.mrf.mxu0
      %v510 = vadd.f32 0.0, %v509
      %v511 = vpop.f32.mrf.mxu0
      %512 = vmatprep.mubr.f32.mxu0 0.0
      %513 = vmatmul.mubr.f32.gmra.mxu0 %v340
      %v514 = vpop.f32.mrf.mxu0
      %v515 = vadd.f32 0.0, %v514
      %v516 = vpop.f32.mrf.mxu0
      %517 = vmatprep.mubr.f32.mxu0 0.0
      %518 = vmatmul.mubr.f32.gmra.mxu0 %v341
      %v519 = vpop.f32.mrf.mxu0
      %v520 = vadd.f32 0.0, %v519
      %v521 = vpop.f32.mrf.mxu0
      %522 = vmatprep.mubr.f32.mxu0 0.0
      %523 = vmatmul.mubr.f32.gmra.mxu0 %v342
      %v524 = vpop.f32.mrf.mxu0
      %v525 = vadd.f32 0.0, %v524
      %v526 = vpop.f32.mrf.mxu0
      %527 = vmatprep.mubr.f32.mxu0 0.0
      %528 = vmatmul.mubr.f32.gmra.mxu0 %v343
      %v529 = vpop.f32.mrf.mxu0
      %v530 = vadd.f32 0.0, %v529
      %v531 = vpop.f32.mrf.mxu0
      %532 = vmatprep.mubr.f32.mxu0 0.0
      %533 = vmatmul.mubr.f32.gmra.mxu0 %v344
      %v534 = vpop.f32.mrf.mxu0
      %v535 = vadd.f32 0.0, %v534
      %v536 = vpop.f32.mrf.mxu0
      %537 = vmatprep.mubr.f32.mxu0 0.0
      %538 = vmatmul.mubr.f32.gmra.mxu0 %v345
      %v539 = vpop.f32.mrf.mxu0
      %v540 = vadd.f32 0.0, %v539
      %v541 = vpop.f32.mrf.mxu0
      %542 = vmatprep.mubr.f32.mxu0 0.0
      %543 = vmatmul.mubr.f32.gmra.mxu0 %v346
      %v544 = vpop.f32.mrf.mxu0
      %v545 = vadd.f32 0.0, %v544
      %v546 = vpop.f32.mrf.mxu0
      %547 = vmatprep.mubr.f32.mxu0 0.0
      %548 = vmatmul.mubr.f32.gmra.mxu0 %v347
      %v549 = vpop.f32.mrf.mxu0
      %v550 = vadd.f32 0.0, %v549
      %v551 = vpop.f32.mrf.mxu0
      %552 = vmatprep.mubr.f32.mxu0 0.0
      %553 = vmatmul.mubr.f32.gmra.mxu0 %v348
      %v554 = vpop.f32.mrf.mxu0
      %v555 = vadd.f32 0.0, %v554
      %v556 = vpop.f32.mrf.mxu0
      %557 = vmatprep.mubr.f32.mxu0 0.0
      %558 = vmatmul.mubr.f32.gmra.mxu0 %v349
      %v559 = vpop.f32.mrf.mxu0
      %v560 = vadd.f32 0.0, %v559
      %v561 = vpop.f32.mrf.mxu0
      %562 = vmatprep.mubr.f32.mxu0 0.0
      %563 = vmatmul.mubr.f32.gmra.mxu0 %v350
      %v564 = vpop.f32.mrf.mxu0
      %v565 = vadd.f32 0.0, %v564
      %v566 = vpop.f32.mrf.mxu0
      %567 = vmatprep.mubr.f32.mxu0 0.0
      %568 = vmatmul.mubr.f32.gmra.mxu0 %v351
      %v569 = vpop.f32.mrf.mxu0
      %v570 = vadd.f32 0.0, %v569
      %v571 = vpop.f32.mrf.mxu0
      %572 = vmatprep.mubr.f32.mxu0 0.0
      %573 = vmatmul.mubr.f32.gmra.mxu0 %v352
      %v574 = vpop.f32.mrf.mxu0
      %v575 = vadd.f32 0.0, %v574
      %v576 = vpop.f32.mrf.mxu0
      %577 = vmatprep.mubr.f32.mxu0 0.0
      %578 = vmatmul.mubr.f32.gmra.mxu0 %v353
      %v579 = vpop.f32.mrf.mxu0
      %v580 = vadd.f32 0.0, %v579
      %v581 = vpop.f32.mrf.mxu0
      %582 = vmatprep.mubr.f32.mxu0 0.0
      %583 = vmatmul.mubr.f32.gmra.mxu0 %v354
      %v584 = vpop.f32.mrf.mxu0
      %v585 = vadd.f32 0.0, %v584
      %v586 = vpop.f32.mrf.mxu0
      %587 = vmatprep.mubr.f32.mxu0 0.0
      %588 = vmatmul.mubr.f32.gmra.mxu0 %v355
      %v589 = vpop.f32.mrf.mxu0
      %v590 = vadd.f32 0.0, %v589
      %v591 = vpop.f32.mrf.mxu0
      %592 = vmatprep.mubr.f32.mxu0 0.0
      %593 = vmatmul.mubr.f32.gmra.mxu0 %v356
      %v594 = vpop.f32.mrf.mxu0
      %v595 = vadd.f32 0.0, %v594
      %v596 = vpop.f32.mrf.mxu0
      %597 = vdwg.mxu0
      %v598 = vadd.f32 %v293, %v440
      %v599 = vadd.f32 %v294, %v445
      %v600 = vadd.f32 %v295, %v450
      %v601 = vadd.f32 %v296, %v455
      %v602 = vadd.f32 %v297, %v460
      %v603 = vadd.f32 %v298, %v465
      %v604 = vadd.f32 %v299, %v470
      %v605 = vadd.f32 %v300, %v475
      %v606 = vadd.f32 %v301, %v480
      %v607 = vadd.f32 %v302, %v485
      %v608 = vadd.f32 %v303, %v490
      %v609 = vadd.f32 %v304, %v495
      %v610 = vadd.f32 %v305, %v500
      %v611 = vadd.f32 %v306, %v505
      %v612 = vadd.f32 %v307, %v510
      %v613 = vadd.f32 %v308, %v515
      %v614 = vadd.f32 %v309, %v520
      %v615 = vadd.f32 %v310, %v525
      %v616 = vadd.f32 %v311, %v530
      %v617 = vadd.f32 %v312, %v535
      %v618 = vadd.f32 %v313, %v540
      %v619 = vadd.f32 %v314, %v545
      %v620 = vadd.f32 %v315, %v550
      %v621 = vadd.f32 %v316, %v555
      %v622 = vadd.f32 %v317, %v560
      %v623 = vadd.f32 %v318, %v565
      %v624 = vadd.f32 %v319, %v570
      %v625 = vadd.f32 %v320, %v575
      %v626 = vadd.f32 %v321, %v580
      %v627 = vadd.f32 %v322, %v585
      %v628 = vadd.f32 %v323, %v590
      %v629 = vadd.f32 %v324, %v595
      %630 = vst [vmem:[#allocation2] sm:$0xff] %v598
      %631 = vst [vmem:[#allocation2 + $0x8] sm:$0xff] %v599
      %632 = vst [vmem:[#allocation2 + $0x10] sm:$0xff] %v600
      %633 = vst [vmem:[#allocation2 + $0x18] sm:$0xff] %v601
      %634 = vst [vmem:[#allocation2 + $0x20] sm:$0xff] %v602
      %635 = vst [vmem:[#allocation2 + $0x28] sm:$0xff] %v603
      %636 = vst [vmem:[#allocation2 + $0x30] sm:$0xff] %v604
      %637 = vst [vmem:[#allocation2 + $0x38] sm:$0xff] %v605
      %638 = vst [vmem:[#allocation2 + $0x40] sm:$0xff] %v606
      %639 = vst [vmem:[#allocation2 + $0x48] sm:$0xff] %v607
      %640 = vst [vmem:[#allocation2 + $0x50] sm:$0xff] %v608
      %641 = vst [vmem:[#allocation2 + $0x58] sm:$0xff] %v609
      %642 = vst [vmem:[#allocation2 + $0x60] sm:$0xff] %v610
      %643 = vst [vmem:[#allocation2 + $0x68] sm:$0xff] %v611
      %644 = vst [vmem:[#allocation2 + $0x70] sm:$0xff] %v612
      %645 = vst [vmem:[#allocation2 + $0x78] sm:$0xff] %v613
      %646 = vst [vmem:[#allocation2 + $0x80] sm:$0xff] %v614
      %647 = vst [vmem:[#allocation2 + $0x88] sm:$0xff] %v615
      %648 = vst [vmem:[#allocation2 + $0x90] sm:$0xff] %v616
      %649 = vst [vmem:[#allocation2 + $0x98] sm:$0xff] %v617
      %650 = vst [vmem:[#allocation2 + $0xa0] sm:$0xff] %v618
      %651 = vst [vmem:[#allocation2 + $0xa8] sm:$0xff] %v619
      %652 = vst [vmem:[#allocation2 + $0xb0] sm:$0xff] %v620
      %653 = vst [vmem:[#allocation2 + $0xb8] sm:$0xff] %v621
      %654 = vst [vmem:[#allocation2 + $0xc0] sm:$0xff] %v622
      %655 = vst [vmem:[#allocation2 + $0xc8] sm:$0xff] %v623
      %656 = vst [vmem:[#allocation2 + $0xd0] sm:$0xff] %v624
      %657 = vst [vmem:[#allocation2 + $0xd8] sm:$0xff] %v625
      %658 = vst [vmem:[#allocation2 + $0xe0] sm:$0xff] %v626
      %659 = vst [vmem:[#allocation2 + $0xe8] sm:$0xff] %v627
      %660 = vst [vmem:[#allocation2 + $0xf0] sm:$0xff] %v628
      %661 = vst [vmem:[#allocation2 + $0xf8] sm:$0xff] %v629
      // Predicated region
      $region37: #{residual_block_forward.5} parent=31 // pred_check
        %p662 = pneg %p257
      $region38: #{residual_block_forward.5} parent=31 // pred_check_branch
        %664 = sbr.rel (%p662) target = $region40
      $region39: #{residual_block_forward.5} parent=31 // pred_region
        %v665 = vld [vmem:[#allocation2] sm:$0xff]
        %v666 = vld [vmem:[#allocation2 + $0x8] sm:$0xff]
        %v667 = vld [vmem:[#allocation2 + $0x10] sm:$0xff]
        %v668 = vld [vmem:[#allocation2 + $0x18] sm:$0xff]
        %v669 = vld [vmem:[#allocation2 + $0x20] sm:$0xff]
        %v670 = vld [vmem:[#allocation2 + $0x28] sm:$0xff]
        %v671 = vld [vmem:[#allocation2 + $0x30] sm:$0xff]
        %v672 = vld [vmem:[#allocation2 + $0x38] sm:$0xff]
        %v673 = vld [vmem:[#allocation2 + $0x40] sm:$0xff]
        %v674 = vld [vmem:[#allocation2 + $0x48] sm:$0xff]
        %v675 = vld [vmem:[#allocation2 + $0x50] sm:$0xff]
        %v676 = vld [vmem:[#allocation2 + $0x58] sm:$0xff]
        %v677 = vld [vmem:[#allocation2 + $0x60] sm:$0xff]
        %v678 = vld [vmem:[#allocation2 + $0x68] sm:$0xff]
        %v679 = vld [vmem:[#allocation2 + $0x70] sm:$0xff]
        %v680 = vld [vmem:[#allocation2 + $0x78] sm:$0xff]
        %v681 = vld [vmem:[#allocation2 + $0x80] sm:$0xff]
        %v682 = vld [vmem:[#allocation2 + $0x88] sm:$0xff]
        %v683 = vld [vmem:[#allocation2 + $0x90] sm:$0xff]
        %v684 = vld [vmem:[#allocation2 + $0x98] sm:$0xff]
        %v685 = vld [vmem:[#allocation2 + $0xa0] sm:$0xff]
        %v686 = vld [vmem:[#allocation2 + $0xa8] sm:$0xff]
        %v687 = vld [vmem:[#allocation2 + $0xb0] sm:$0xff]
        %v688 = vld [vmem:[#allocation2 + $0xb8] sm:$0xff]
        %v689 = vld [vmem:[#allocation2 + $0xc0] sm:$0xff]
        %v690 = vld [vmem:[#allocation2 + $0xc8] sm:$0xff]
        %v691 = vld [vmem:[#allocation2 + $0xd0] sm:$0xff]
        %v692 = vld [vmem:[#allocation2 + $0xd8] sm:$0xff]
        %v693 = vld [vmem:[#allocation2 + $0xe0] sm:$0xff]
        %v694 = vld [vmem:[#allocation2 + $0xe8] sm:$0xff]
        %v695 = vld [vmem:[#allocation2 + $0xf0] sm:$0xff]
        %v696 = vld [vmem:[#allocation2 + $0xf8] sm:$0xff]
        %v697 = vld [vmem:[%s2] sm:$0x1]
        %v699 = vlaneseq
        %v700 = vshrl.u32 %v699, 7
        %v701 = vsub.s32 0, %v700
        %v702 = vrot.slane %v697, %v701
        %v704 = vadd.f32 %v665, %v702
        %v705 = vadd.f32 %v666, %v702
        %v706 = vadd.f32 %v667, %v702
        %v707 = vadd.f32 %v668, %v702
        %v708 = vadd.f32 %v669, %v702
        %v709 = vadd.f32 %v670, %v702
        %v710 = vadd.f32 %v671, %v702
        %v711 = vadd.f32 %v672, %v702
        %v712 = vadd.f32 %v673, %v702
        %v713 = vadd.f32 %v674, %v702
        %v714 = vadd.f32 %v675, %v702
        %v715 = vadd.f32 %v676, %v702
        %v716 = vadd.f32 %v677, %v702
        %v717 = vadd.f32 %v678, %v702
        %v718 = vadd.f32 %v679, %v702
        %v719 = vadd.f32 %v680, %v702
        %v720 = vadd.f32 %v681, %v702
        %v721 = vadd.f32 %v682, %v702
        %v722 = vadd.f32 %v683, %v702
        %v723 = vadd.f32 %v684, %v702
        %v724 = vadd.f32 %v685, %v702
        %v725 = vadd.f32 %v686, %v702
        %v726 = vadd.f32 %v687, %v702
        %v727 = vadd.f32 %v688, %v702
        %v728 = vadd.f32 %v689, %v702
        %v729 = vadd.f32 %v690, %v702
        %v730 = vadd.f32 %v691, %v702
        %v731 = vadd.f32 %v692, %v702
        %v732 = vadd.f32 %v693, %v702
        %v733 = vadd.f32 %v694, %v702
        %v734 = vadd.f32 %v695, %v702
        %v735 = vadd.f32 %v696, %v702
        %736 = vst [vmem:[%s251] sm:$0xff] %v704
        %737 = vst [vmem:[%s251 + $0x8] sm:$0xff] %v705
        %738 = vst [vmem:[%s251 + $0x10] sm:$0xff] %v706
        %739 = vst [vmem:[%s251 + $0x18] sm:$0xff] %v707
        %740 = vst [vmem:[%s251 + $0x20] sm:$0xff] %v708
        %741 = vst [vmem:[%s251 + $0x28] sm:$0xff] %v709
        %742 = vst [vmem:[%s251 + $0x30] sm:$0xff] %v710
        %743 = vst [vmem:[%s251 + $0x38] sm:$0xff] %v711
        %744 = vst [vmem:[%s251 + $0x40] sm:$0xff] %v712
        %745 = vst [vmem:[%s251 + $0x48] sm:$0xff] %v713
        %746 = vst [vmem:[%s251 + $0x50] sm:$0xff] %v714
        %747 = vst [vmem:[%s251 + $0x58] sm:$0xff] %v715
        %748 = vst [vmem:[%s251 + $0x60] sm:$0xff] %v716
        %749 = vst [vmem:[%s251 + $0x68] sm:$0xff] %v717
        %750 = vst [vmem:[%s251 + $0x70] sm:$0xff] %v718
        %751 = vst [vmem:[%s251 + $0x78] sm:$0xff] %v719
        %752 = vst [vmem:[%s251 + $0x80] sm:$0xff] %v720
        %753 = vst [vmem:[%s251 + $0x88] sm:$0xff] %v721
        %754 = vst [vmem:[%s251 + $0x90] sm:$0xff] %v722
        %755 = vst [vmem:[%s251 + $0x98] sm:$0xff] %v723
        %756 = vst [vmem:[%s251 + $0xa0] sm:$0xff] %v724
        %757 = vst [vmem:[%s251 + $0xa8] sm:$0xff] %v725
        %758 = vst [vmem:[%s251 + $0xb0] sm:$0xff] %v726
        %759 = vst [vmem:[%s251 + $0xb8] sm:$0xff] %v727
        %760 = vst [vmem:[%s251 + $0xc0] sm:$0xff] %v728
        %761 = vst [vmem:[%s251 + $0xc8] sm:$0xff] %v729
        %762 = vst [vmem:[%s251 + $0xd0] sm:$0xff] %v730
        %763 = vst [vmem:[%s251 + $0xd8] sm:$0xff] %v731
        %764 = vst [vmem:[%s251 + $0xe0] sm:$0xff] %v732
        %765 = vst [vmem:[%s251 + $0xe8] sm:$0xff] %v733
        %766 = vst [vmem:[%s251 + $0xf0] sm:$0xff] %v734
        %767 = vst [vmem:[%s251 + $0xf8] sm:$0xff] %v735
        %v768 = vadd.f32 %v704, %v705
        %v769 = vadd.f32 %v768, %v706
        %v770 = vadd.f32 %v769, %v707
        %v771 = vadd.f32 %v770, %v708
        %v772 = vadd.f32 %v771, %v709
        %v773 = vadd.f32 %v772, %v710
        %v774 = vadd.f32 %v773, %v711
        %v775 = vadd.f32 %v774, %v712
        %v776 = vadd.f32 %v775, %v713
        %v777 = vadd.f32 %v776, %v714
        %v778 = vadd.f32 %v777, %v715
        %v779 = vadd.f32 %v778, %v716
        %v780 = vadd.f32 %v779, %v717
        %v781 = vadd.f32 %v780, %v718
        %v782 = vadd.f32 %v781, %v719
        %v783 = vadd.f32 %v782, %v720
        %v784 = vadd.f32 %v783, %v721
        %v785 = vadd.f32 %v784, %v722
        %v786 = vadd.f32 %v785, %v723
        %v787 = vadd.f32 %v786, %v724
        %v788 = vadd.f32 %v787, %v725
        %v789 = vadd.f32 %v788, %v726
        %v790 = vadd.f32 %v789, %v727
        %v791 = vadd.f32 %v790, %v728
        %v792 = vadd.f32 %v791, %v729
        %v793 = vadd.f32 %v792, %v730
        %v794 = vadd.f32 %v793, %v731
        %v795 = vadd.f32 %v794, %v732
        %v796 = vadd.f32 %v795, %v733
        %v797 = vadd.f32 %v796, %v734
        %v798 = vadd.f32 %v797, %v735
        %v799 = vrot.slane %v798, 4
        %v800 = vadd.f32 %v798, %v799
        %v801 = vrot.slane %v800, 2
        %v802 = vadd.f32 %v800, %v801
        %v803 = vrot.slane %v802, 1
        %v804 = vadd.f32 %v802, %v803
        %v805 = vmul.f32 %v704, %v704
        %v806 = vmul.f32 %v705, %v705
        %v807 = vmul.f32 %v706, %v706
        %v808 = vmul.f32 %v707, %v707
        %v809 = vmul.f32 %v708, %v708
        %v810 = vmul.f32 %v709, %v709
        %v811 = vmul.f32 %v710, %v710
        %v812 = vmul.f32 %v711, %v711
        %v813 = vmul.f32 %v712, %v712
        %v814 = vmul.f32 %v713, %v713
        %v815 = vmul.f32 %v714, %v714
        %v816 = vmul.f32 %v715, %v715
        %v817 = vmul.f32 %v716, %v716
        %v818 = vmul.f32 %v717, %v717
        %v819 = vmul.f32 %v718, %v718
        %v820 = vmul.f32 %v719, %v719
        %v821 = vmul.f32 %v720, %v720
        %v822 = vmul.f32 %v721, %v721
        %v823 = vmul.f32 %v722, %v722
        %v824 = vmul.f32 %v723, %v723
        %v825 = vmul.f32 %v724, %v724
        %v826 = vmul.f32 %v725, %v725
        %v827 = vmul.f32 %v726, %v726
        %v828 = vmul.f32 %v727, %v727
        %v829 = vmul.f32 %v728, %v728
        %v830 = vmul.f32 %v729, %v729
        %v831 = vmul.f32 %v730, %v730
        %v832 = vmul.f32 %v731, %v731
        %v833 = vmul.f32 %v732, %v732
        %v834 = vmul.f32 %v733, %v733
        %v835 = vmul.f32 %v734, %v734
        %v836 = vmul.f32 %v735, %v735
        %v837 = vadd.f32 %v805, %v806
        %v838 = vadd.f32 %v837, %v807
        %v839 = vadd.f32 %v838, %v808
        %v840 = vadd.f32 %v839, %v809
        %v841 = vadd.f32 %v840, %v810
        %v842 = vadd.f32 %v841, %v811
        %v843 = vadd.f32 %v842, %v812
        %v844 = vadd.f32 %v843, %v813
        %v845 = vadd.f32 %v844, %v814
        %v846 = vadd.f32 %v845, %v815
        %v847 = vadd.f32 %v846, %v816
        %v848 = vadd.f32 %v847, %v817
        %v849 = vadd.f32 %v848, %v818
        %v850 = vadd.f32 %v849, %v819
        %v851 = vadd.f32 %v850, %v820
        %v852 = vadd.f32 %v851, %v821
        %v853 = vadd.f32 %v852, %v822
        %v854 = vadd.f32 %v853, %v823
        %v855 = vadd.f32 %v854, %v824
        %v856 = vadd.f32 %v855, %v825
        %v857 = vadd.f32 %v856, %v826
        %v858 = vadd.f32 %v857, %v827
        %v859 = vadd.f32 %v858, %v828
        %v860 = vadd.f32 %v859, %v829
        %v861 = vadd.f32 %v860, %v830
        %v862 = vadd.f32 %v861, %v831
        %v863 = vadd.f32 %v862, %v832
        %v864 = vadd.f32 %v863, %v833
        %v865 = vadd.f32 %v864, %v834
        %v866 = vadd.f32 %v865, %v835
        %v867 = vadd.f32 %v866, %v836
        %v868 = vrot.slane %v867, 4
        %v869 = vadd.f32 %v867, %v868
        %v870 = vrot.slane %v869, 2
        %v871 = vadd.f32 %v869, %v870
        %v872 = vrot.slane %v871, 1
        %v873 = vadd.f32 %v871, %v872
        %vm874 = vcmask 1040384
        %v875 = vsel %vm874, %v804, %v873
        %876 = vst [vmem:[%s256] sm:$0x3] %v875
      $region40: #{residual_block_forward.5} parent=31 // pred_fallthru
        _
      %s877 = smul.u32 32, %s20
      %p878 = scmp.lt.s32.totalorder %s877, 63
      %s879 = scalar_select %p878, %s877, 63
      %s880 = smul.addr %s879, 8
      %s881 = scalar_lea.vmem %s3, %s880
      %p882 = scmp.lt.s32.totalorder %s20, 1
      %s883 = scalar_select %p882, %s20, 1
      %s884 = smul.addr %s883, 2
      %s885 = scalar_lea.vmem %s4, %s884
      // Predicated region
      $region41: #{residual_block_forward.5} parent=31 // pred_check
        %p886 = pneg %p121
      $region42: #{residual_block_forward.5} parent=31 // pred_check_branch
        %888 = sbr.rel (%p886) target = $region44
      $region43: #{residual_block_forward.5} parent=31 // pred_region
        %s889 = smul.u32 32, %s20
      $region44: #{residual_block_forward.5} parent=31 // pred_fallthru
        _
      // Predicated region
      $region45: #{residual_block_forward.5} parent=31 // pred_check
        %p890 = pneg %p147
      $region46: #{residual_block_forward.5} parent=31 // pred_check_branch
        %892 = sbr.rel (%p890) target = $region48
      $region47: #{residual_block_forward.5} parent=31 // pred_region
        _
      $region48: #{residual_block_forward.5} parent=31 // pred_fallthru
        _
    $region32: #{residual_block_forward.5} parent=5 // pred_fallthru
      _
    %p893 = scmp.le.s32.totalorder 2, %s11
    // Predicated region
    $region49: #{residual_block_forward.5} parent=5 // pred_check
      %p894 = pneg %p893
    $region50: #{residual_block_forward.5} parent=5 // pred_check_branch
      %896 = sbr.rel (%p894) target = $region52
    $region51: #{residual_block_forward.5} parent=5 // pred_region
      %s897 = ssub.s32 %s11, 2
      // Predicated region
      $region53: #{residual_block_forward.5} parent=51 // pred_check
        %p898 = pneg %p127
      $region54: #{residual_block_forward.5} parent=51 // pred_check_branch
        %900 = sbr.rel (%p898) target = $region56
      $region55: #{residual_block_forward.5} parent=51 // pred_region
        %s901 = smul.u32 32, %s22
        %p902 = scmp.lt.s32.totalorder %s901, 63
        %s903 = scalar_select %p902, %s901, 63
        %s904 = smul.addr %s903, 8
        %s905 = scalar_lea.vmem %s3, %s904
      $region56: #{residual_block_forward.5} parent=51 // pred_fallthru
        _
      // Predicated region
      $region57: #{residual_block_forward.5} parent=51 // pred_check
        %p906 = pneg %p153
      $region58: #{residual_block_forward.5} parent=51 // pred_check_branch
        %908 = sbr.rel (%p906) target = $region60
      $region59: #{residual_block_forward.5} parent=51 // pred_region
        %p909 = scmp.lt.s32.totalorder %s22, 1
        %s910 = scalar_select %p909, %s22, 1
        %s911 = smul.addr %s910, 2
        %s912 = scalar_lea.vmem %s4, %s911
      $region60: #{residual_block_forward.5} parent=51 // pred_fallthru
        _
    $region52: #{residual_block_forward.5} parent=5 // pred_fallthru
      _
  $region6: #{residual_block_forward.5} parent=0 // loop_footer
    %s15 = sadd.s32 1, %s11
  $region7: #{residual_block_forward.5} parent=0 // loop_footer_branch
    %10 = sbr.rel target = $region3
  $region8: #{residual_block_forward.5} parent=0 // loop_exit
    _

// kernel: residual_block_forward.9
$region0: #{residual_block_forward.9}
  #allocation0 [shape = 'u32[]', space=smem, size = 0x4, offset = 0x4, fixed_abs, tag = 'smem constant byte address 0x4 - core index']
  #allocation1 [shape = 'u32[144,128]{1,0:T(1,128)}', space=vmem, size = 0x12000, scoped, tag = 'internal scratch']
  %s0 = inlined_call_operand.vmem [shape: f32[512,128], index: 0, kind: input, shape index: {}]
  %s1 = inlined_call_operand.vmem [shape: f32[1,128], index: 1, kind: input, shape index: {}]
  %s2 = inlined_call_operand.vmem [shape: f32[1,128], index: 2, kind: input, shape index: {}]
  %s3 = inlined_call_operand.vmem [shape: f32[512,128], index: 3, kind: input, shape index: {}]
  %s4 = inlined_call_operand.vmem [shape: f32[1,128], index: 4, kind: input, shape index: {}]
  %s5 = inlined_call_operand.vmem [shape: f32[1,128], index: 5, kind: input, shape index: {}]
  %s6 = inlined_call_operand.vmem [shape: f32[512,128], index: 6, kind: output, shape index: {}]
  %s7 = sld [smem:[#allocation0]]
  $region57: #{residual_block_forward.9} parent=0
    _
  %s9 = ssub.s32 1, %s7
  %s10 = scalar_select 0, %s9, %s7
  loop: start=0, step=1, limit=4
  $region2: #{residual_block_forward.9} parent=0 // loop_pre_header
    _
  $region3: #{residual_block_forward.9} parent=0 // loop_header
    %s12 = sphi 0, %s16
    %p13 = scmp.ge.s32.totalorder %s12, 4
    %s22 = sphi 0, %s24
    %s25 = sphi 0, %s22
    %s26 = sphi 0, %s25
    %s42 = sphi 0, %s26
    %s46 = sphi 0, %s46
    %s48 = sphi 0, %s46
    %s49 = sphi 0, %s48
    %s63 = sphi 0, %s49
    %s67 = sphi 0, %s67
    %s69 = sphi 0, %s67
    %s70 = sphi 0, %s69
    %s84 = sphi 0, %s70
    %s90 = sphi 0, %s92
    %s93 = sphi 0, %s90
    %s94 = sphi 0, %s93
    %s110 = sphi 0, %s94
    %s114 = sphi 0, %s114
    %s116 = sphi 0, %s114
    %s117 = sphi 0, %s116
    %s131 = sphi 0, %s117
    %s135 = sphi 0, %s135
    %s137 = sphi 0, %s135
    %s138 = sphi 0, %s137
    %s152 = sphi 0, %s138
    %s158 = sphi 0, %s160
    %s161 = sphi 0, %s158
    %s162 = sphi 0, %s161
    %s178 = sphi 0, %s162
  $region4: #{residual_block_forward.9} parent=0 // loop_header_branch
    %15 = sbr.rel (%p13) target = $region8
  $region5: #{residual_block_forward.9} parent=0 // loop_body
    %s17 = ssub.s32 %s12, 1
    %s18 = ssub.s32 %s12, 2
    %s19 = sadd.s32 %s12, 1
    %s20 = ssub.s32 %s12, %s19
    %p21 = scmp.eq.s32.totalorder %s20, 0
    %s23 = sadd.s32 %s22, 1
    %s24 = scalar_select %p21, %s22, %s23
    %p27 = pneg %p21
    %p28 = scmp.eq.s32.totalorder %s12, 1
    %p29 = por %p27, %p28
    %p30 = scmp.ne.s32.totalorder %s22, %s25
    %p31 = scmp.eq.s32.totalorder %s12, 0
    %p32 = por %p30, %p31
    %p33 = scmp.ne.s32.totalorder %s22, %s25
    %p34 = scmp.eq.s32.totalorder %s17, 1
    %p35 = por %p33, %p34
    %p36 = scmp.ne.s32.totalorder %s25, %s26
    %p37 = scmp.eq.s32.totalorder %s17, 0
    %p38 = por %p36, %p37
    %p39 = scmp.ne.s32.totalorder %s25, %s26
    %p40 = scmp.eq.s32.totalorder %s18, 1
    %p41 = por %p39, %p40
    %p43 = scmp.ne.s32.totalorder %s26, %s42
    %p44 = scmp.eq.s32.totalorder %s18, 0
    %p45 = por %p43, %p44
    %s47 = sadd.s32 %s46, 1
    %p50 = scmp.eq.s32.totalorder %s12, 1
    %p51 = scmp.ne.s32.totalorder %s46, %s48
    %p52 = scmp.eq.s32.totalorder %s12, 0
    %p53 = por %p51, %p52
    %p54 = scmp.ne.s32.totalorder %s46, %s48
    %p55 = scmp.eq.s32.totalorder %s17, 1
    %p56 = por %p54, %p55
    %p57 = scmp.ne.s32.totalorder %s48, %s49
    %p58 = scmp.eq.s32.totalorder %s17, 0
    %p59 = por %p57, %p58
    %p60 = scmp.ne.s32.totalorder %s48, %s49
    %p61 = scmp.eq.s32.totalorder %s18, 1
    %p62 = por %p60, %p61
    %p64 = scmp.ne.s32.totalorder %s49, %s63
    %p65 = scmp.eq.s32.totalorder %s18, 0
    %p66 = por %p64, %p65
    %s68 = sadd.s32 %s67, 1
    %p71 = scmp.eq.s32.totalorder %s12, 1
    %p72 = scmp.ne.s32.totalorder %s67, %s69
    %p73 = scmp.eq.s32.totalorder %s12, 0
    %p74 = por %p72, %p73
    %p75 = scmp.ne.s32.totalorder %s67, %s69
    %p76 = scmp.eq.s32.totalorder %s17, 1
    %p77 = por %p75, %p76
    %p78 = scmp.ne.s32.totalorder %s69, %s70
    %p79 = scmp.eq.s32.totalorder %s17, 0
    %p80 = por %p78, %p79
    %p81 = scmp.ne.s32.totalorder %s69, %s70
    %p82 = scmp.eq.s32.totalorder %s18, 1
    %p83 = por %p81, %p82
    %p85 = scmp.ne.s32.totalorder %s70, %s84
    %p86 = scmp.eq.s32.totalorder %s18, 0
    %p87 = por %p85, %p86
    %s88 = ssub.s32 %s12, %s19
    %p89 = scmp.eq.s32.totalorder %s88, 0
    %s91 = sadd.s32 %s90, 1
    %s92 = scalar_select %p89, %s90, %s91
    %p95 = pneg %p89
    %p96 = scmp.eq.s32.totalorder %s12, 1
    %p97 = por %p95, %p96
    %p98 = scmp.ne.s32.totalorder %s90, %s93
    %p99 = scmp.eq.s32.totalorder %s12, 0
    %p100 = por %p98, %p99
    %p101 = scmp.ne.s32.totalorder %s90, %s93
    %p102 = scmp.eq.s32.totalorder %s17, 1
    %p103 = por %p101, %p102
    %p104 = scmp.ne.s32.totalorder %s93, %s94
    %p105 = scmp.eq.s32.totalorder %s17, 0
    %p106 = por %p104, %p105
    %p107 = scmp.ne.s32.totalorder %s93, %s94
    %p108 = scmp.eq.s32.totalorder %s18, 1
    %p109 = por %p107, %p108
    %p111 = scmp.ne.s32.totalorder %s94, %s110
    %p112 = scmp.eq.s32.totalorder %s18, 0
    %p113 = por %p111, %p112
    %s115 = sadd.s32 %s114, 1
    %p118 = scmp.eq.s32.totalorder %s12, 1
    %p119 = scmp.ne.s32.totalorder %s114, %s116
    %p120 = scmp.eq.s32.totalorder %s12, 0
    %p121 = por %p119, %p120
    %p122 = scmp.ne.s32.totalorder %s114, %s116
    %p123 = scmp.eq.s32.totalorder %s17, 1
    %p124 = por %p122, %p123
    %p125 = scmp.ne.s32.totalorder %s116, %s117
    %p126 = scmp.eq.s32.totalorder %s17, 0
    %p127 = por %p125, %p126
    %p128 = scmp.ne.s32.totalorder %s116, %s117
    %p129 = scmp.eq.s32.totalorder %s18, 1
    %p130 = por %p128, %p129
    %p132 = scmp.ne.s32.totalorder %s117, %s131
    %p133 = scmp.eq.s32.totalorder %s18, 0
    %p134 = por %p132, %p133
    %s136 = sadd.s32 %s135, 1
    %p139 = scmp.eq.s32.totalorder %s12, 1
    %p140 = scmp.ne.s32.totalorder %s135, %s137
    %p141 = scmp.eq.s32.totalorder %s12, 0
    %p142 = por %p140, %p141
    %p143 = scmp.ne.s32.totalorder %s135, %s137
    %p144 = scmp.eq.s32.totalorder %s17, 1
    %p145 = por %p143, %p144
    %p146 = scmp.ne.s32.totalorder %s137, %s138
    %p147 = scmp.eq.s32.totalorder %s17, 0
    %p148 = por %p146, %p147
    %p149 = scmp.ne.s32.totalorder %s137, %s138
    %p150 = scmp.eq.s32.totalorder %s18, 1
    %p151 = por %p149, %p150
    %p153 = scmp.ne.s32.totalorder %s138, %s152
    %p154 = scmp.eq.s32.totalorder %s18, 0
    %p155 = por %p153, %p154
    %s156 = ssub.s32 %s12, %s19
    %p157 = scmp.eq.s32.totalorder %s156, 0
    %s159 = sadd.s32 %s158, 1
    %s160 = scalar_select %p157, %s158, %s159
    %p163 = pneg %p157
    %p164 = scmp.eq.s32.totalorder %s12, 1
    %p165 = por %p163, %p164
    %p166 = scmp.ne.s32.totalorder %s158, %s161
    %p167 = scmp.eq.s32.totalorder %s12, 0
    %p168 = por %p166, %p167
    %p169 = scmp.ne.s32.totalorder %s158, %s161
    %p170 = scmp.eq.s32.totalorder %s17, 1
    %p171 = por %p169, %p170
    %p172 = scmp.ne.s32.totalorder %s161, %s162
    %p173 = scmp.eq.s32.totalorder %s17, 0
    %p174 = por %p172, %p173
    %p175 = scmp.ne.s32.totalorder %s161, %s162
    %p176 = scmp.eq.s32.totalorder %s18, 1
    %p177 = por %p175, %p176
    %p179 = scmp.ne.s32.totalorder %s162, %s178
    %p180 = scmp.eq.s32.totalorder %s18, 0
    %p181 = por %p179, %p180
    %p182 = scmp.le.s32.totalorder 1, %s12
    %p183 = scmp.lt.s32.totalorder %s12, 3
    %p184 = pnand %p182, %p183
    %p185 = pneg %p184
    // Predicated region
    $region9: #{residual_block_forward.9} parent=5 // pred_check
      _
    $region10: #{residual_block_forward.9} parent=5 // pred_check_branch
      %187 = sbr.rel (%p184) target = $region12
    $region11: #{residual_block_forward.9} parent=5 // pred_region
      %s188 = ssub.s32 %s12, 1
      // Predicated region
      $region13: #{residual_block_forward.9} parent=11 // pred_check
        %p189 = pneg %p59
      $region14: #{residual_block_forward.9} parent=11 // pred_check_branch
        %191 = sbr.rel (%p189) target = $region16
      $region15: #{residual_block_forward.9} parent=11 // pred_region
        _
      $region16: #{residual_block_forward.9} parent=11 // pred_fallthru
        _
      // Predicated region
      $region17: #{residual_block_forward.9} parent=11 // pred_check
        %p192 = pneg %p80
      $region18: #{residual_block_forward.9} parent=11 // pred_check_branch
        %194 = sbr.rel (%p192) target = $region20
      $region19: #{residual_block_forward.9} parent=11 // pred_region
        _
      $region20: #{residual_block_forward.9} parent=11 // pred_fallthru
        _
      // Predicated region
      $region21: #{residual_block_forward.9} parent=11 // pred_check
        %p195 = pneg %p127
      $region22: #{residual_block_forward.9} parent=11 // pred_check_branch
        %197 = sbr.rel (%p195) target = $region24
      $region23: #{residual_block_forward.9} parent=11 // pred_region
        _
      $region24: #{residual_block_forward.9} parent=11 // pred_fallthru
        _
      // Predicated region
      $region25: #{residual_block_forward.9} parent=11 // pred_check
        %p198 = pneg %p148
      $region26: #{residual_block_forward.9} parent=11 // pred_check_branch
        %200 = sbr.rel (%p198) target = $region28
      $region27: #{residual_block_forward.9} parent=11 // pred_region
        _
      $region28: #{residual_block_forward.9} parent=11 // pred_fallthru
        _
    $region12: #{residual_block_forward.9} parent=5 // pred_fallthru
      _
    %p201 = scmp.lt.s32.totalorder %s12, 2
    // Predicated region
    $region29: #{residual_block_forward.9} parent=5 // pred_check
      %p202 = pneg %p201
    $region30: #{residual_block_forward.9} parent=5 // pred_check_branch
      %204 = sbr.rel (%p202) target = $region32
    $region31: #{residual_block_forward.9} parent=5 // pred_region
      // Predicated region
      $region33: #{residual_block_forward.9} parent=31 // pred_check
        %p205 = pneg %p32
      $region34: #{residual_block_forward.9} parent=31 // pred_check_branch
        %207 = sbr.rel (%p205) target = $region36
      $region35: #{residual_block_forward.9} parent=31 // pred_region
        %s208 = smul.u32 32, %s12
        %p209 = scmp.lt.s32.totalorder %s208, 63
        %s210 = scalar_select %p209, %s208, 63
        %s211 = smul.addr %s210, 8
        %s212 = scalar_lea.vmem %s0, %s211
        %s213 = smul.u32 32, %s12
      $region36: #{residual_block_forward.9} parent=31 // pred_fallthru
        _
      // Predicated region
      $region37: #{residual_block_forward.9} parent=31 // pred_check
        %p214 = pneg %p100
      $region38: #{residual_block_forward.9} parent=31 // pred_check_branch
        %216 = sbr.rel (%p214) target = $region40
      $region39: #{residual_block_forward.9} parent=31 // pred_region
        %s217 = smul.u32 32, %s12
        %p218 = scmp.lt.s32.totalorder %s217, 63
        %s219 = scalar_select %p218, %s217, 63
        %s220 = smul.addr %s219, 8
        %s221 = scalar_lea.vmem %s3, %s220
        %s222 = smul.u32 32, %s12
      $region40: #{residual_block_forward.9} parent=31 // pred_fallthru
        _
    $region32: #{residual_block_forward.9} parent=5 // pred_fallthru
      _
    %p223 = scmp.le.s32.totalorder 1, %s12
    %p224 = scmp.lt.s32.totalorder %s12, 3
    %p225 = pnand %p223, %p224
    %p226 = pneg %p225
    // Predicated region
    $region41: #{residual_block_forward.9} parent=5 // pred_check
      _
    $region42: #{residual_block_forward.9} parent=5 // pred_check_branch
      %228 = sbr.rel (%p225) target = $region44
    $region43: #{residual_block_forward.9} parent=5 // pred_region
      %s229 = ssub.s32 %s12, 1
      %s230 = smul.u32 32, %s17
      %p231 = scmp.lt.s32.totalorder %s230, 63
      %s232 = scalar_select %p231, %s230, 63
      %s233 = smul.addr %s232, 8
      %s234 = scalar_lea.vmem %s0, %s233
      %p235 = pneg %p38
      %p236 = pneg %p35
      %p237 = pneg %p59
      %p238 = pneg %p56
      %p239 = pneg %p80
      %p240 = pneg %p77
      %s241 = smul.u32 32, %s17
      %p242 = scmp.lt.s32.totalorder %s241, 63
      %s243 = scalar_select %p242, %s241, 63
      %s244 = smul.addr %s243, 8
      %s245 = scalar_lea.vmem %s3, %s244
      %p246 = pneg %p106
      %p247 = pneg %p103
      %p248 = pneg %p127
      %p249 = pneg %p124
      %p250 = pneg %p148
      %p251 = pneg %p145
      %p252 = pneg %p174
      %p253 = pneg %p171
      %s254 = smul.u32 32, %s17
      %p255 = scmp.lt.s32.totalorder %s254, 63
      %s256 = scalar_select %p255, %s254, 63
      %s257 = smul.addr %s256, 8
      %s258 = scalar_lea.vmem %s6, %s257
      %s259 = smul.u32 32, %s17
      %p260 = scmp.lt.s32.totalorder %s259, 63
      %s261 = scalar_select %p260, %s259, 63
      %s262 = smul.addr %s261, 8
      %s263 = scalar_lea.vmem %s0, %s262
      %s264 = smul.u32 32, %s17
      %s265 = smul.u32 32, %s17
      %p266 = scmp.lt.s32.totalorder %s265, 63
      %s267 = scalar_select %p266, %s265, 63
      %s268 = smul.addr %s267, 8
      %s269 = scalar_lea.vmem %s3, %s268
      %s270 = smul.u32 32, %s17
      %s271 = smul.u32 32, %s17
      %p272 = scmp.lt.s32.totalorder %s271, 63
      %s273 = scalar_select %p272, %s271, 63
      %s274 = smul.addr %s273, 8
      %s275 = scalar_lea.vmem %s6, %s274
      %s276 = smul.u32 32, %s17
      %v277 = vld [vmem:[%s263] sm:$0xff]
      %v278 = vld [vmem:[%s263 + $0x8] sm:$0xff]
      %v279 = vld [vmem:[%s263 + $0x10] sm:$0xff]
      %v280 = vld [vmem:[%s263 + $0x18] sm:$0xff]
      %v281 = vld [vmem:[%s263 + $0x20] sm:$0xff]
      %v282 = vld [vmem:[%s263 + $0x28] sm:$0xff]
      %v283 = vld [vmem:[%s263 + $0x30] sm:$0xff]
      %v284 = vld [vmem:[%s263 + $0x38] sm:$0xff]
      %v285 = vld [vmem:[%s263 + $0x40] sm:$0xff]
      %v286 = vld [vmem:[%s263 + $0x48] sm:$0xff]
      %v287 = vld [vmem:[%s263 + $0x50] sm:$0xff]
      %v288 = vld [vmem:[%s263 + $0x58] sm:$0xff]
      %v289 = vld [vmem:[%s263 + $0x60] sm:$0xff]
      %v290 = vld [vmem:[%s263 + $0x68] sm:$0xff]
      %v291 = vld [vmem:[%s263 + $0x70] sm:$0xff]
      %v292 = vld [vmem:[%s263 + $0x78] sm:$0xff]
      %v293 = vld [vmem:[%s263 + $0x80] sm:$0xff]
      %v294 = vld [vmem:[%s263 + $0x88] sm:$0xff]
      %v295 = vld [vmem:[%s263 + $0x90] sm:$0xff]
      %v296 = vld [vmem:[%s263 + $0x98] sm:$0xff]
      %v297 = vld [vmem:[%s263 + $0xa0] sm:$0xff]
      %v298 = vld [vmem:[%s263 + $0xa8] sm:$0xff]
      %v299 = vld [vmem:[%s263 + $0xb0] sm:$0xff]
      %v300 = vld [vmem:[%s263 + $0xb8] sm:$0xff]
      %v301 = vld [vmem:[%s263 + $0xc0] sm:$0xff]
      %v302 = vld [vmem:[%s263 + $0xc8] sm:$0xff]
      %v303 = vld [vmem:[%s263 + $0xd0] sm:$0xff]
      %v304 = vld [vmem:[%s263 + $0xd8] sm:$0xff]
      %v305 = vld [vmem:[%s263 + $0xe0] sm:$0xff]
      %v306 = vld [vmem:[%s263 + $0xe8] sm:$0xff]
      %v307 = vld [vmem:[%s263 + $0xf0] sm:$0xff]
      %v308 = vld [vmem:[%s263 + $0xf8] sm:$0xff]
      %v309 = vld [vmem:[%s1] sm:$0x1]
      %v311 = vlaneseq
      %v312 = vshrl.u32 %v311, 7
      %v313 = vsub.s32 0, %v312
      %v314 = vrot.slane %v309, %v313
      %v316 = vmul.f32 %v277, %v314
      %v317 = vmul.f32 %v278, %v314
      %v318 = vmul.f32 %v279, %v314
      %v319 = vmul.f32 %v280, %v314
      %v320 = vmul.f32 %v281, %v314
      %v321 = vmul.f32 %v282, %v314
      %v322 = vmul.f32 %v283, %v314
      %v323 = vmul.f32 %v284, %v314
      %v324 = vmul.f32 %v285, %v314
      %v325 = vmul.f32 %v286, %v314
      %v326 = vmul.f32 %v287, %v314
      %v327 = vmul.f32 %v288, %v314
      %v328 = vmul.f32 %v289, %v314
      %v329 = vmul.f32 %v290, %v314
      %v330 = vmul.f32 %v291, %v314
      %v331 = vmul.f32 %v292, %v314
      %v332 = vmul.f32 %v293, %v314
      %v333 = vmul.f32 %v294, %v314
      %v334 = vmul.f32 %v295, %v314
      %v335 = vmul.f32 %v296, %v314
      %v336 = vmul.f32 %v297, %v314
      %v337 = vmul.f32 %v298, %v314
      %v338 = vmul.f32 %v299, %v314
      %v339 = vmul.f32 %v300, %v314
      %v340 = vmul.f32 %v301, %v314
      %v341 = vmul.f32 %v302, %v314
      %v342 = vmul.f32 %v303, %v314
      %v343 = vmul.f32 %v304, %v314
      %v344 = vmul.f32 %v305, %v314
      %v345 = vmul.f32 %v306, %v314
      %v346 = vmul.f32 %v307, %v314
      %v347 = vmul.f32 %v308, %v314
      %v348 = vld [vmem:[%s2] sm:$0x1]
      %v350 = vlaneseq
      %v351 = vshrl.u32 %v350, 7
      %v352 = vsub.s32 0, %v351
      %v353 = vrot.slane %v348, %v352
      %v355 = vadd.f32 %v316, %v353
      %v356 = vadd.f32 %v317, %v353
      %v357 = vadd.f32 %v318, %v353
      %v358 = vadd.f32 %v319, %v353
      %v359 = vadd.f32 %v320, %v353
      %v360 = vadd.f32 %v321, %v353
      %v361 = vadd.f32 %v322, %v353
      %v362 = vadd.f32 %v323, %v353
      %v363 = vadd.f32 %v324, %v353
      %v364 = vadd.f32 %v325, %v353
      %v365 = vadd.f32 %v326, %v353
      %v366 = vadd.f32 %v327, %v353
      %v367 = vadd.f32 %v328, %v353
      %v368 = vadd.f32 %v329, %v353
      %v369 = vadd.f32 %v330, %v353
      %v370 = vadd.f32 %v331, %v353
      %v371 = vadd.f32 %v332, %v353
      %v372 = vadd.f32 %v333, %v353
      %v373 = vadd.f32 %v334, %v353
      %v374 = vadd.f32 %v335, %v353
      %v375 = vadd.f32 %v336, %v353
      %v376 = vadd.f32 %v337, %v353
      %v377 = vadd.f32 %v338, %v353
      %v378 = vadd.f32 %v339, %v353
      %v379 = vadd.f32 %v340, %v353
      %v380 = vadd.f32 %v341, %v353
      %v381 = vadd.f32 %v342, %v353
      %v382 = vadd.f32 %v343, %v353
      %v383 = vadd.f32 %v344, %v353
      %v384 = vadd.f32 %v345, %v353
      %v385 = vadd.f32 %v346, %v353
      %v386 = vadd.f32 %v347, %v353
      %v387 = vld [vmem:[%s269] sm:$0xff]
      %v388 = vld [vmem:[%s269 + $0x8] sm:$0xff]
      %v389 = vld [vmem:[%s269 + $0x10] sm:$0xff]
      %v390 = vld [vmem:[%s269 + $0x18] sm:$0xff]
      %v391 = vld [vmem:[%s269 + $0x20] sm:$0xff]
      %v392 = vld [vmem:[%s269 + $0x28] sm:$0xff]
      %v393 = vld [vmem:[%s269 + $0x30] sm:$0xff]
      %v394 = vld [vmem:[%s269 + $0x38] sm:$0xff]
      %v395 = vld [vmem:[%s269 + $0x40] sm:$0xff]
      %v396 = vld [vmem:[%s269 + $0x48] sm:$0xff]
      %v397 = vld [vmem:[%s269 + $0x50] sm:$0xff]
      %v398 = vld [vmem:[%s269 + $0x58] sm:$0xff]
      %v399 = vld [vmem:[%s269 + $0x60] sm:$0xff]
      %v400 = vld [vmem:[%s269 + $0x68] sm:$0xff]
      %v401 = vld [vmem:[%s269 + $0x70] sm:$0xff]
      %v402 = vld [vmem:[%s269 + $0x78] sm:$0xff]
      %v403 = vld [vmem:[%s269 + $0x80] sm:$0xff]
      %v404 = vld [vmem:[%s269 + $0x88] sm:$0xff]
      %v405 = vld [vmem:[%s269 + $0x90] sm:$0xff]
      %v406 = vld [vmem:[%s269 + $0x98] sm:$0xff]
      %v407 = vld [vmem:[%s269 + $0xa0] sm:$0xff]
      %v408 = vld [vmem:[%s269 + $0xa8] sm:$0xff]
      %v409 = vld [vmem:[%s269 + $0xb0] sm:$0xff]
      %v410 = vld [vmem:[%s269 + $0xb8] sm:$0xff]
      %v411 = vld [vmem:[%s269 + $0xc0] sm:$0xff]
      %v412 = vld [vmem:[%s269 + $0xc8] sm:$0xff]
      %v413 = vld [vmem:[%s269 + $0xd0] sm:$0xff]
      %v414 = vld [vmem:[%s269 + $0xd8] sm:$0xff]
      %v415 = vld [vmem:[%s269 + $0xe0] sm:$0xff]
      %v416 = vld [vmem:[%s269 + $0xe8] sm:$0xff]
      %v417 = vld [vmem:[%s269 + $0xf0] sm:$0xff]
      %v418 = vld [vmem:[%s269 + $0xf8] sm:$0xff]
      %v419 = vld [vmem:[%s4] sm:$0x1]
      %v421 = vlaneseq
      %v422 = vshrl.u32 %v421, 7
      %v423 = vsub.s32 0, %v422
      %v424 = vrot.slane %v419, %v423
      %v426 = vmul.f32 %v387, %v424
      %v427 = vmul.f32 %v388, %v424
      %v428 = vmul.f32 %v389, %v424
      %v429 = vmul.f32 %v390, %v424
      %v430 = vmul.f32 %v391, %v424
      %v431 = vmul.f32 %v392, %v424
      %v432 = vmul.f32 %v393, %v424
      %v433 = vmul.f32 %v394, %v424
      %v434 = vmul.f32 %v395, %v424
      %v435 = vmul.f32 %v396, %v424
      %v436 = vmul.f32 %v397, %v424
      %v437 = vmul.f32 %v398, %v424
      %v438 = vmul.f32 %v399, %v424
      %v439 = vmul.f32 %v400, %v424
      %v440 = vmul.f32 %v401, %v424
      %v441 = vmul.f32 %v402, %v424
      %v442 = vmul.f32 %v403, %v424
      %v443 = vmul.f32 %v404, %v424
      %v444 = vmul.f32 %v405, %v424
      %v445 = vmul.f32 %v406, %v424
      %v446 = vmul.f32 %v407, %v424
      %v447 = vmul.f32 %v408, %v424
      %v448 = vmul.f32 %v409, %v424
      %v449 = vmul.f32 %v410, %v424
      %v450 = vmul.f32 %v411, %v424
      %v451 = vmul.f32 %v412, %v424
      %v452 = vmul.f32 %v413, %v424
      %v453 = vmul.f32 %v414, %v424
      %v454 = vmul.f32 %v415, %v424
      %v455 = vmul.f32 %v416, %v424
      %v456 = vmul.f32 %v417, %v424
      %v457 = vmul.f32 %v418, %v424
      %v458 = vld [vmem:[%s5] sm:$0x1]
      %v460 = vlaneseq
      %v461 = vshrl.u32 %v460, 7
      %v462 = vsub.s32 0, %v461
      %v463 = vrot.slane %v458, %v462
      %v465 = vadd.f32 %v426, %v463
      %v466 = vadd.f32 %v427, %v463
      %v467 = vadd.f32 %v428, %v463
      %v468 = vadd.f32 %v429, %v463
      %v469 = vadd.f32 %v430, %v463
      %v470 = vadd.f32 %v431, %v463
      %v471 = vadd.f32 %v432, %v463
      %v472 = vadd.f32 %v433, %v463
      %v473 = vadd.f32 %v434, %v463
      %v474 = vadd.f32 %v435, %v463
      %v475 = vadd.f32 %v436, %v463
      %v476 = vadd.f32 %v437, %v463
      %v477 = vadd.f32 %v438, %v463
      %v478 = vadd.f32 %v439, %v463
      %v479 = vadd.f32 %v440, %v463
      %v480 = vadd.f32 %v441, %v463
      %v481 = vadd.f32 %v442, %v463
      %v482 = vadd.f32 %v443, %v463
      %v483 = vadd.f32 %v444, %v463
      %v484 = vadd.f32 %v445, %v463
      %v485 = vadd.f32 %v446, %v463
      %v486 = vadd.f32 %v447, %v463
      %v487 = vadd.f32 %v448, %v463
      %v488 = vadd.f32 %v449, %v463
      %v489 = vadd.f32 %v450, %v463
      %v490 = vadd.f32 %v451, %v463
      %v491 = vadd.f32 %v452, %v463
      %v492 = vadd.f32 %v453, %v463
      %v493 = vadd.f32 %v454, %v463
      %v494 = vadd.f32 %v455, %v463
      %v495 = vadd.f32 %v456, %v463
      %v496 = vadd.f32 %v457, %v463
      %v497 = vadd.f32 %v355, %v465
      %v498 = vadd.f32 %v356, %v466
      %v499 = vadd.f32 %v357, %v467
      %v500 = vadd.f32 %v358, %v468
      %v501 = vadd.f32 %v359, %v469
      %v502 = vadd.f32 %v360, %v470
      %v503 = vadd.f32 %v361, %v471
      %v504 = vadd.f32 %v362, %v472
      %v505 = vadd.f32 %v363, %v473
      %v506 = vadd.f32 %v364, %v474
      %v507 = vadd.f32 %v365, %v475
      %v508 = vadd.f32 %v366, %v476
      %v509 = vadd.f32 %v367, %v477
      %v510 = vadd.f32 %v368, %v478
      %v511 = vadd.f32 %v369, %v479
      %v512 = vadd.f32 %v370, %v480
      %v513 = vadd.f32 %v371, %v481
      %v514 = vadd.f32 %v372, %v482
      %v515 = vadd.f32 %v373, %v483
      %v516 = vadd.f32 %v374, %v484
      %v517 = vadd.f32 %v375, %v485
      %v518 = vadd.f32 %v376, %v486
      %v519 = vadd.f32 %v377, %v487
      %v520 = vadd.f32 %v378, %v488
      %v521 = vadd.f32 %v379, %v489
      %v522 = vadd.f32 %v380, %v490
      %v523 = vadd.f32 %v381, %v491
      %v524 = vadd.f32 %v382, %v492
      %v525 = vadd.f32 %v383, %v493
      %v526 = vadd.f32 %v384, %v494
      %v527 = vadd.f32 %v385, %v495
      %v528 = vadd.f32 %v386, %v496
      %v529 = vmax.f32 %v497, 0.0
      %v530 = vmax.f32 %v498, 0.0
      %v531 = vmax.f32 %v499, 0.0
      %v532 = vmax.f32 %v500, 0.0
      %v533 = vmax.f32 %v501, 0.0
      %v534 = vmax.f32 %v502, 0.0
      %v535 = vmax.f32 %v503, 0.0
      %v536 = vmax.f32 %v504, 0.0
      %v537 = vmax.f32 %v505, 0.0
      %v538 = vmax.f32 %v506, 0.0
      %v539 = vmax.f32 %v507, 0.0
      %v540 = vmax.f32 %v508, 0.0
      %v541 = vmax.f32 %v509, 0.0
      %v542 = vmax.f32 %v510, 0.0
      %v543 = vmax.f32 %v511, 0.0
      %v544 = vmax.f32 %v512, 0.0
      %v545 = vmax.f32 %v513, 0.0
      %v546 = vmax.f32 %v514, 0.0
      %v547 = vmax.f32 %v515, 0.0
      %v548 = vmax.f32 %v516, 0.0
      %v549 = vmax.f32 %v517, 0.0
      %v550 = vmax.f32 %v518, 0.0
      %v551 = vmax.f32 %v519, 0.0
      %v552 = vmax.f32 %v520, 0.0
      %v553 = vmax.f32 %v521, 0.0
      %v554 = vmax.f32 %v522, 0.0
      %v555 = vmax.f32 %v523, 0.0
      %v556 = vmax.f32 %v524, 0.0
      %v557 = vmax.f32 %v525, 0.0
      %v558 = vmax.f32 %v526, 0.0
      %v559 = vmax.f32 %v527, 0.0
      %v560 = vmax.f32 %v528, 0.0
      %561 = vst [vmem:[%s275] sm:$0xff] %v529
      %562 = vst [vmem:[%s275 + $0x8] sm:$0xff] %v530
      %563 = vst [vmem:[%s275 + $0x10] sm:$0xff] %v531
      %564 = vst [vmem:[%s275 + $0x18] sm:$0xff] %v532
      %565 = vst [vmem:[%s275 + $0x20] sm:$0xff] %v533
      %566 = vst [vmem:[%s275 + $0x28] sm:$0xff] %v534
      %567 = vst [vmem:[%s275 + $0x30] sm:$0xff] %v535
      %568 = vst [vmem:[%s275 + $0x38] sm:$0xff] %v536
      %569 = vst [vmem:[%s275 + $0x40] sm:$0xff] %v537
      %570 = vst [vmem:[%s275 + $0x48] sm:$0xff] %v538
      %571 = vst [vmem:[%s275 + $0x50] sm:$0xff] %v539
      %572 = vst [vmem:[%s275 + $0x58] sm:$0xff] %v540
      %573 = vst [vmem:[%s275 + $0x60] sm:$0xff] %v541
      %574 = vst [vmem:[%s275 + $0x68] sm:$0xff] %v542
      %575 = vst [vmem:[%s275 + $0x70] sm:$0xff] %v543
      %576 = vst [vmem:[%s275 + $0x78] sm:$0xff] %v544
      %577 = vst [vmem:[%s275 + $0x80] sm:$0xff] %v545
      %578 = vst [vmem:[%s275 + $0x88] sm:$0xff] %v546
      %579 = vst [vmem:[%s275 + $0x90] sm:$0xff] %v547
      %580 = vst [vmem:[%s275 + $0x98] sm:$0xff] %v548
      %581 = vst [vmem:[%s275 + $0xa0] sm:$0xff] %v549
      %582 = vst [vmem:[%s275 + $0xa8] sm:$0xff] %v550
      %583 = vst [vmem:[%s275 + $0xb0] sm:$0xff] %v551
      %584 = vst [vmem:[%s275 + $0xb8] sm:$0xff] %v552
      %585 = vst [vmem:[%s275 + $0xc0] sm:$0xff] %v553
      %586 = vst [vmem:[%s275 + $0xc8] sm:$0xff] %v554
      %587 = vst [vmem:[%s275 + $0xd0] sm:$0xff] %v555
      %588 = vst [vmem:[%s275 + $0xd8] sm:$0xff] %v556
      %589 = vst [vmem:[%s275 + $0xe0] sm:$0xff] %v557
      %590 = vst [vmem:[%s275 + $0xe8] sm:$0xff] %v558
      %591 = vst [vmem:[%s275 + $0xf0] sm:$0xff] %v559
      %592 = vst [vmem:[%s275 + $0xf8] sm:$0xff] %v560
      %s593 = smul.u32 32, %s17
      %p594 = scmp.lt.s32.totalorder %s593, 63
      %s595 = scalar_select %p594, %s593, 63
      %s596 = smul.addr %s595, 8
      %s597 = scalar_lea.vmem %s6, %s596
      // Predicated region
      $region45: #{residual_block_forward.9} parent=43 // pred_check
        %p598 = pneg %p171
      $region46: #{residual_block_forward.9} parent=43 // pred_check_branch
        %600 = sbr.rel (%p598) target = $region48
      $region47: #{residual_block_forward.9} parent=43 // pred_region
        %s601 = smul.u32 32, %s17
      $region48: #{residual_block_forward.9} parent=43 // pred_fallthru
        _
    $region44: #{residual_block_forward.9} parent=5 // pred_fallthru
      _
    %p602 = scmp.le.s32.totalorder 2, %s12
    // Predicated region
    $region49: #{residual_block_forward.9} parent=5 // pred_check
      %p603 = pneg %p602
    $region50: #{residual_block_forward.9} parent=5 // pred_check_branch
      %605 = sbr.rel (%p603) target = $region52
    $region51: #{residual_block_forward.9} parent=5 // pred_region
      %s606 = ssub.s32 %s12, 2
      // Predicated region
      $region53: #{residual_block_forward.9} parent=51 // pred_check
        %p607 = pneg %p177
      $region54: #{residual_block_forward.9} parent=51 // pred_check_branch
        %609 = sbr.rel (%p607) target = $region56
      $region55: #{residual_block_forward.9} parent=51 // pred_region
        %s610 = smul.u32 32, %s18
        %p611 = scmp.lt.s32.totalorder %s610, 63
        %s612 = scalar_select %p611, %s610, 63
        %s613 = smul.addr %s612, 8
        %s614 = scalar_lea.vmem %s6, %s613
      $region56: #{residual_block_forward.9} parent=51 // pred_fallthru
        _
    $region52: #{residual_block_forward.9} parent=5 // pred_fallthru
      _
  $region6: #{residual_block_forward.9} parent=0 // loop_footer
    %s16 = sadd.s32 1, %s12
  $region7: #{residual_block_forward.9} parent=0 // loop_footer_branch
    %11 = sbr.rel target = $region3
  $region8: #{residual_block_forward.9} parent=0 // loop_exit
    _

</llo_original>
